<compile_context>
chip_gen: v7x
topology: tpu7x:2x2x1
jax: 0.10.0
libtpu: 0.0.40
codegen_flags: <defaults>
</compile_context>

<pallas_src>
import functools

import jax
import jax.numpy as jnp
from jax import lax
from jax.experimental import pallas as pl
from jax.experimental.pallas import tpu as pltpu


# ----------------------------------------------------------------------------
# Stage 1 (hot kernel): partial sums of ReLU(h @ W1 + b1) over instance tiles.
# ----------------------------------------------------------------------------
def _fold_rows(x):
    """(tile_n, d) -> (8, d): fold rows down to one sublane tile (cheap VPU adds)."""
    tile_n, d = x.shape
    return jnp.sum(x.reshape(tile_n // 8, 8, d), axis=0)


def _clam_stage1_kernel(h_ref, w1_ref, b1_ref, partials_ref, acc_ref,
                        *, n_valid, needs_mask):
    """grid = (num_splits, steps_per_split).

    Axis 0 ("parallel") shards the instance stream across TensorCores (v7x);
    axis 1 ("arbitrary") is the serial reduction over instance tiles.
    acc_ref is an (8, d_hid) f32 running partial sum (full sublane tile,
    lane-dense so its stores are unmasked).
    """
    j = pl.program_id(1)
    tile_n = h_ref.shape[0]

    @pl.when(j == 0)
    def _():
        acc_ref[...] = jnp.zeros_like(acc_ref)

    # Hot path: per-tile cast to bf16 (no separate XLA cast pass over h),
    # (tile_n, 1024)bf16 @ (1024, 512)bf16 -> f32 on the MXU, bias + ReLU
    # on the VPU in f32.
    h1 = jnp.dot(h_ref[...].astype(jnp.bfloat16), w1_ref[...],
                 preferred_element_type=jnp.float32)
    h1 = jnp.maximum(h1 + b1_ref[...], 0.0)

    if needs_mask:
        # Logical first-row index of this tile.  (Independent of the clamped
        # index_map, so a dummy tile -- possible only when total_steps does
        # not divide evenly across splits -- masks to exactly zero.)
        tile_start = (pl.program_id(0) * pl.num_programs(1) + j) * tile_n
        is_full = tile_start + tile_n <= n_valid

        @pl.when(is_full)                      # hot branch: no mask work
        def _():
            acc_ref[...] += _fold_rows(h1)

        @pl.when(jnp.logical_not(is_full))     # boundary / dummy tile only
        def _():
            rows = tile_start + lax.broadcasted_iota(jnp.int32, (tile_n, 1), 0)
            # Select (not multiply): safe even if the partial-block garbage
            # rows produced NaN/Inf in h1.
            acc_ref[...] += _fold_rows(jnp.where(rows < n_valid, h1, 0.0))
    else:
        acc_ref[...] += _fold_rows(h1)

    @pl.when(j == pl.num_programs(1) - 1)
    def _():
        partials_ref[...] = acc_ref[...][None]


# ----------------------------------------------------------------------------
# Wrapper
# ----------------------------------------------------------------------------
@functools.partial(jax.jit, static_argnames=("tile_n", "num_splits"))
def _clam_forward_impl(h, w1, b1, w2, b2, *, tile_n, num_splits):
    n, d_in = h.shape
    d_hid = w1.shape[1]

    total_steps = -(-n // tile_n)                       # cdiv(n, tile_n)
    steps_per_split = -(-total_steps // num_splits)
    coverage = num_splits * steps_per_split * tile_n
    needs_mask = coverage != n
    last_block = total_steps - 1

    # W1 is small (1 MiB bf16) and resident in the kernel; casting it once in
    # the wrapper is negligible and halves its VMEM/DMA footprint.
    w1_bf16 = w1.astype(jnp.bfloat16)

    def h_index_map(s, j):
        # Clamp so a dummy step re-reads an in-range block; its rows are
        # masked to zero inside the kernel.
        return (jnp.minimum(s * steps_per_split + j, last_block), 0)

    stage1_cost = pl.CostEstimate(
        flops=2 * n * d_in * d_hid,
        transcendentals=0,
        bytes_accessed=(n * d_in * h.dtype.itemsize + d_in * d_hid * 2
                        + d_hid * 4 + num_splits * 8 * d_hid * 4),
    )

    partials = pl.pallas_call(
        functools.partial(_clam_stage1_kernel, n_valid=n, needs_mask=needs_mask),
        out_shape=jax.ShapeDtypeStruct((num_splits, 8, d_hid), jnp.float32),
        grid_spec=pltpu.PrefetchScalarGridSpec(
            num_scalar_prefetch=0,
            grid=(num_splits, steps_per_split),
            in_specs=[
                pl.BlockSpec((tile_n, d_in), h_index_map),           # h tile
                pl.BlockSpec((d_in, d_hid), lambda s, j: (0, 0)),    # W1 resident
                pl.BlockSpec((1, d_hid), lambda s, j: (0, 0)),       # b1
            ],
            out_specs=pl.BlockSpec((1, 8, d_hid), lambda s, j: (s, 0, 0)),
            scratch_shapes=[pltpu.VMEM((8, d_hid), jnp.float32)],
        ),
        compiler_params=pltpu.CompilerParams(
            dimension_semantics=("parallel", "arbitrary"),
            vmem_limit_bytes=32 * 1024 * 1024),
        cost_estimate=stage1_cost,
    )(h, w1_bf16, b1)

    # ---- Tiny epilogue in plain JAX (~2K FLOP): one fewer kernel launch. ----
    total = jnp.sum(partials, axis=(0, 1))                   # (d_hid,)
    m = (total * (1.0 / n))[None, :]                         # (1, d_hid) f32 mean
    logits = jnp.dot(m, w2, preferred_element_type=jnp.float32) + b2
    probs = jax.nn.softmax(logits, axis=1)
    # torch.topk(...,1)[1] tie rule == first index of the max == jnp.argmax.
    yhat = jnp.argmax(logits, axis=1).astype(jnp.int32)[:, None]
    return logits, probs, yhat


def _num_tensorcores_per_chip():
    # Megacore (2 TensorCores/chip) only on v7x-class parts; on single-TC
    # chips (v5e/v6e) a second "parallel" split is just a serial loop with
    # extra bookkeeping.
    try:
        kind = jax.devices()[0].device_kind.lower()
    except Exception:
        return 1
    return 2 if "v7" in kind else 1


def clam_sb_pool_forward(h, w1, b1, w2, b2, *, tile_n=512, num_splits=None):
    n = h.shape[0]
    if n == 0:
        raise ValueError("CLAM_SB_Pool forward requires at least one instance.")
    if tile_n % 8 != 0:
        raise ValueError("tile_n must be a multiple of 8.")
    # Clamp the tile to the (8-rounded) bag size so tiny bags don't waste MXU
    # work / VMEM on an oversized block.
    tile_eff = max(8, min(int(tile_n), ((n + 7) // 8) * 8))
    if num_splits is None:
        # Split across TensorCores only on megacore parts AND when both
        # splits get at least one full tile (load-balance guard).
        num_splits = 2 if (_num_tensorcores_per_chip() == 2
                           and n >= 2 * tile_eff) else 1
    return _clam_forward_impl(h, w1, b1, w2, b2,
                              tile_n=tile_eff, num_splits=int(num_splits))


# ----------------------------------------------------------------------------
# Pure-JAX reference (same bf16 cast on the hot matmul, f32 accumulation).
# A strict-f32 PyTorch forward would differ by ~1e-3 relative (bf16 MXU).
# ----------------------------------------------------------------------------
def _reference(h, w1, b1, w2, b2):
    h1 = jnp.dot(h.astype(jnp.bfloat16), w1.astype(jnp.bfloat16),
                 preferred_element_type=jnp.float32)
    h1 = jnp.maximum(h1 + b1, 0.0)
    m = jnp.mean(h1, axis=0, keepdims=True)
    logits = jnp.dot(m, w2, preferred_element_type=jnp.float32) + b2
    probs = jax.nn.softmax(logits, axis=1)
    yhat = jnp.argmax(logits, axis=1).astype(jnp.int32)[:, None]
    return logits, probs, yhat


if __name__ == "__main__":
    # size_arg='small' -> fc: 1024 -> 512, classifiers: 512 -> n_classes=2
    D_IN, D_HID, N_CLS = 1024, 512, 2

    key = jax.random.PRNGKey(0)
    k_h, k_w1, k_b1, k_w2, k_b2, k_h2 = jax.random.split(key, 6)

    # Deterministic synthetic parameters (xavier-ish scale); no checkpoint load.
    # TODO(synk): initialize_weights() in the repo is a training-time init,
    # not part of the forward math, so synthetic params are used here.
    w1 = jax.random.normal(k_w1, (D_IN, D_HID), dtype=jnp.float32) * 0.02
    b1 = jax.random.normal(k_b1, (1, D_HID), dtype=jnp.float32) * 0.01
    w2 = jax.random.normal(k_w2, (D_HID, N_CLS), dtype=jnp.float32) * 0.02
    b2 = jax.random.normal(k_b2, (1, N_CLS), dtype=jnp.float32) * 0.01

    # Case 1: small bag (N=16 < tile) -> single exact tile, no masking.
    h_small = jax.random.normal(k_h, (16, D_IN), dtype=jnp.float32)
    out_small = clam_sb_pool_forward(h_small, w1, b1, w2, b2)
    jax.block_until_ready(out_small)

    # Case 2: multi-tile bag with a ragged tail (N=200, tile_n=64 -> 4 tiles,
    # last one partial) -> exercises the pl.when-gated boundary mask.
    h_big = jax.random.normal(k_h2, (200, D_IN), dtype=jnp.float32)
    out_big = clam_sb_pool_forward(h_big, w1, b1, w2, b2, tile_n=64)
    jax.block_until_ready(out_big)

    for (logits, probs, yhat), h in ((out_small, h_small), (out_big, h_big)):
        ref_logits, ref_prob, ref_hat = _reference(h, w1, b1, w2, b2)
        assert jnp.allclose(logits, ref_logits, atol=2e-3, rtol=2e-3), (
            logits, ref_logits)
        assert jnp.allclose(probs, ref_prob, atol=2e-3, rtol=2e-3), (
            probs, ref_prob)
        assert jnp.array_equal(yhat, ref_hat), (yhat, ref_hat)

    print("KERNEL_OK")
</pallas_src>

<mosaic_0001>
module attributes {stable_mosaic.version = 11 : i64} {
  func.func @_clam_stage1_kernel(%arg0: i32, %arg1: i32, %arg2: memref<16x1024xf32, #tpu.memory_space<vmem>>, %arg3: memref<1024x512xbf16, #tpu.memory_space<vmem>>, %arg4: memref<1x512xf32, #tpu.memory_space<vmem>>, %arg5: memref<1x8x512xf32, #tpu.memory_space<vmem>>, %arg6: memref<8x512xf32, #tpu.memory_space<vmem>>) attributes {dimension_semantics = [#tpu.dimension_semantics<parallel>, #tpu.dimension_semantics<arbitrary>], iteration_bounds = array<i64: 1, 1>, scalar_prefetch = 0 : i64, scratch_operands = 1 : i64, tpu.core_type = #tpu.core_type<tc>, window_params = [{transform_indices = @transform_0, window_bounds = array<i64: 16, 1024>}, {pipeline_mode = #tpu.pipeline_mode<synchronous>, transform_indices = @transform_1, window_bounds = array<i64: 1024, 512>}, {pipeline_mode = #tpu.pipeline_mode<synchronous>, transform_indices = @transform_2, window_bounds = array<i64: 1, 512>}, {transform_indices = @transform_3, window_bounds = array<i64: 1, 8, 512>}]} {
    %c0_i32 = arith.constant 0 : i32
    %0 = arith.cmpi eq, %arg1, %c0_i32 : i32
    %1 = arith.extui %0 : i1 to i32
    %c0_i32_0 = arith.constant 0 : i32
    %2 = arith.cmpi ne, %1, %c0_i32_0 : i32
    scf.if %2 {
      %cst_14 = arith.constant 0.000000e+00 : f32
      %20 = vector.broadcast %cst_14 : f32 to vector<8x512xf32>
      %c0_15 = arith.constant 0 : index
      %c0_16 = arith.constant 0 : index
      %21 = vector.load %arg6[%c0_15, %c0_16] : memref<8x512xf32, #tpu.memory_space<vmem>>, vector<8x512xf32>
      tpu.vector_store %arg6[%c0_15, %c0_16], %20 {strides = array<i32>} : memref<8x512xf32, #tpu.memory_space<vmem>>, vector<8x512xf32>,
    } else {
    }
    %c0 = arith.constant 0 : index
    %c0_1 = arith.constant 0 : index
    %3 = vector.load %arg2[%c0, %c0_1] : memref<16x1024xf32, #tpu.memory_space<vmem>>, vector<16x1024xf32>
    %4 = arith.truncf %3 : vector<16x1024xf32> to vector<16x1024xbf16>
    %c0_2 = arith.constant 0 : index
    %c0_3 = arith.constant 0 : index
    %5 = vector.load %arg3[%c0_2, %c0_3] : memref<1024x512xbf16, #tpu.memory_space<vmem>>, vector<1024x512xbf16>
    %cst = arith.constant dense<0.000000e+00> : vector<16x512xf32>
    %6 = tpu.matmul %4, %5, %cst {dimension_numbers = #tpu.dot_dimension_numbers<[1], [0], [0], [1], [0, 0, 1, 1], [], []>} : vector<16x1024xbf16>, vector<1024x512xbf16>, vector<16x512xf32> -> vector<16x512xf32>
    %c0_4 = arith.constant 0 : index
    %c0_5 = arith.constant 0 : index
    %7 = vector.load %arg4[%c0_4, %c0_5] : memref<1x512xf32, #tpu.memory_space<vmem>>, vector<1x512xf32>
    %8 = vector.broadcast %7 : vector<1x512xf32> to vector<16x512xf32>
    %9 = arith.addf %6, %8 : vector<16x512xf32>
    %cst_6 = arith.constant 0.000000e+00 : f32
    %10 = vector.broadcast %cst_6 : f32 to vector<16x512xf32>
    %11 = arith.maximumf %9, %10 : vector<16x512xf32>
    %c0_7 = arith.constant 0 : index
    %c0_8 = arith.constant 0 : index
    %12 = vector.load %arg6[%c0_7, %c0_8] : memref<8x512xf32, #tpu.memory_space<vmem>>, vector<8x512xf32>
    %13 = vector.shape_cast %11 : vector<16x512xf32> to vector<2x8x512xf32>
    %cst_9 = arith.constant dense<0.000000e+00> : vector<8x512xf32>
    %14 = vector.multi_reduction <add>, %13, %cst_9 [0] : vector<2x8x512xf32> to vector<8x512xf32>
    %15 = arith.addf %12, %14 : vector<8x512xf32>
    %c0_10 = arith.constant 0 : index
    %c0_11 = arith.constant 0 : index
    %16 = vector.load %arg6[%c0_10, %c0_11] : memref<8x512xf32, #tpu.memory_space<vmem>>, vector<8x512xf32>
    tpu.vector_store %arg6[%c0_10, %c0_11], %15 {strides = array<i32>} : memref<8x512xf32, #tpu.memory_space<vmem>>, vector<8x512xf32>,
    %c0_i32_12 = arith.constant 0 : i32
    %17 = arith.cmpi eq, %arg1, %c0_i32_12 : i32
    %18 = arith.extui %17 : i1 to i32
    %c0_i32_13 = arith.constant 0 : i32
    %19 = arith.cmpi ne, %18, %c0_i32_13 : i32
    scf.if %19 {
      %c0_14 = arith.constant 0 : index
      %c0_15 = arith.constant 0 : index
      %20 = vector.load %arg6[%c0_14, %c0_15] : memref<8x512xf32, #tpu.memory_space<vmem>>, vector<8x512xf32>
      %21 = vector.shape_cast %20 : vector<8x512xf32> to vector<1x8x512xf32>
      %c0_16 = arith.constant 0 : index
      %c0_17 = arith.constant 0 : index
      %c0_18 = arith.constant 0 : index
      %22 = vector.load %arg5[%c0_16, %c0_17, %c0_18] : memref<1x8x512xf32, #tpu.memory_space<vmem>>, vector<1x8x512xf32>
      tpu.vector_store %arg5[%c0_16, %c0_17, %c0_18], %21 {strides = array<i32>} : memref<1x8x512xf32, #tpu.memory_space<vmem>>, vector<1x8x512xf32>,
    } else {
    }
    return
  }
  func.func @transform_0(%arg0: i32, %arg1: i32) -> (i32, i32) {
    %c1_i32 = arith.constant 1 : i32
    %0 = arith.muli %arg0, %c1_i32 : i32
    %1 = arith.addi %0, %arg1 : i32
    %c0_i32 = arith.constant 0 : i32
    %2 = arith.minsi %1, %c0_i32 : i32
    %c0_i32_0 = arith.constant 0 : i32
    %c0_i32_1 = arith.constant 0 : i32
    return %2, %c0_i32_0 : i32, i32
  }
  func.func @transform_1(%arg0: i32, %arg1: i32) -> (i32, i32) {
    %c0_i32 = arith.constant 0 : i32
    %c0_i32_0 = arith.constant 0 : i32
    %c0_i32_1 = arith.constant 0 : i32
    return %c0_i32, %c0_i32_0 : i32, i32
  }
  func.func @transform_2(%arg0: i32, %arg1: i32) -> (i32, i32) {
    %c0_i32 = arith.constant 0 : i32
    %c0_i32_0 = arith.constant 0 : i32
    %c0_i32_1 = arith.constant 0 : i32
    return %c0_i32, %c0_i32_0 : i32, i32
  }
  func.func @transform_3(%arg0: i32, %arg1: i32) -> (i32, i32, i32) {
    %c0_i32 = arith.constant 0 : i32
    %c0_i32_0 = arith.constant 0 : i32
    %c0_i32_1 = arith.constant 0 : i32
    return %arg0, %c0_i32, %c0_i32_0 : i32, i32, i32
  }
}

</mosaic_0001>

<llo_original>
// kernel: _clam_forward_impl.1
$region0: #{_clam_forward_impl.1}
  #allocation0 [shape = 'u32[]', space=smem, size = 0x4, offset = 0x4, fixed_abs, tag = 'smem constant byte address 0x4 - core index']
  #allocation1 [shape = 'u32[144,128]{1,0:T(1,128)}', space=vmem, size = 0x12000, scoped, tag = 'internal scratch']
  #allocation2 [shape = 'f32[8,512]{1,0:T(8,128)}', space=vmem, size = 0x4000, scoped, tag = 'scratch operand']
  %s0 = inlined_call_operand.vmem [shape: f32[16,1024], index: 0, kind: input, shape index: {}]
  %s1 = inlined_call_operand.vmem [shape: bf16[1024,512], index: 1, kind: input, shape index: {}]
  %s2 = inlined_call_operand.vmem [shape: f32[1,512], index: 2, kind: input, shape index: {}]
  %s3 = inlined_call_operand.vmem [shape: f32[1,8,512], index: 3, kind: output, shape index: {}]
  %s4 = sld [smem:[#allocation0]]
  $region30: #{_clam_forward_impl.1} parent=0
    _
  %s6 = ssub.s32 1, %s4
  %s7 = scalar_select 0, %s6, %s4
  // Predicated region
  $region2: #{_clam_forward_impl.1} parent=0 // pred_check
    _
  $region3: #{_clam_forward_impl.1} parent=0 // pred_check_branch
    %9 = sbr.rel (0) target = $region5
  $region4: #{_clam_forward_impl.1} parent=0 // pred_region
    %s10 = sadd.s32 0, 0
    %p11 = scmp.lt.s32.totalorder %s10, 0
    %s12 = scalar_select %p11, %s10, 0
    %s13 = smul.u32 2, %s12
    %p14 = scmp.lt.s32.totalorder %s13, 1
    %s15 = scalar_select %p14, %s13, 1
    %s16 = smul.addr %s15, 8
    %s17 = smul.addr %s16, 8
    %s18 = scalar_lea.vmem %s0, %s17
    %s19 = sadd.s32 0, 0
    %p20 = scmp.lt.s32.totalorder %s19, 0
    %s21 = scalar_select %p20, %s19, 0
    %s22 = smul.u32 2, %s21
  $region5: #{_clam_forward_impl.1} parent=0 // pred_fallthru
    _
  // Predicated region
  $region6: #{_clam_forward_impl.1} parent=0 // pred_check
    _
  $region7: #{_clam_forward_impl.1} parent=0 // pred_check_branch
    %24 = sbr.rel (0) target = $region9
  $region8: #{_clam_forward_impl.1} parent=0 // pred_region
    _
  $region9: #{_clam_forward_impl.1} parent=0 // pred_fallthru
    _
  // Predicated region
  $region10: #{_clam_forward_impl.1} parent=0 // pred_check
    _
  $region11: #{_clam_forward_impl.1} parent=0 // pred_check_branch
    %26 = sbr.rel (0) target = $region13
  $region12: #{_clam_forward_impl.1} parent=0 // pred_region
    _
  $region13: #{_clam_forward_impl.1} parent=0 // pred_fallthru
    _
  %s27 = sadd.s32 0, 0
  %p28 = scmp.lt.s32.totalorder %s27, 0
  %s29 = scalar_select %p28, %s27, 0
  %s30 = smul.u32 2, %s29
  %p31 = scmp.lt.s32.totalorder %s30, 1
  %s32 = scalar_select %p31, %s30, 1
  %s33 = smul.addr %s32, 8
  %s34 = smul.addr %s33, 8
  %s35 = scalar_lea.vmem %s0, %s34
  %s36 = sadd.s32 0, 0
  %p37 = scmp.lt.s32.totalorder %s36, 0
  %s38 = scalar_select %p37, %s36, 0
  %s39 = smul.u32 2, %s38
  %p40 = scmp.lt.s32.totalorder %s39, 1
  %s41 = scalar_select %p40, %s39, 1
  %s42 = smul.addr %s41, 8
  %s43 = smul.addr %s42, 8
  %s44 = scalar_lea.vmem %s0, %s43
  %s45 = sadd.s32 0, 0
  %p46 = scmp.lt.s32.totalorder %s45, 0
  %s47 = scalar_select %p46, %s45, 0
  %s48 = smul.u32 2, %s47
  %p49 = scmp.eq.s32.totalorder 0, 0
  // Predicated region
  $region14: #{_clam_forward_impl.1} parent=0 // pred_check
    %p50 = pneg %p49
  $region15: #{_clam_forward_impl.1} parent=0 // pred_check_branch
    %52 = sbr.rel (%p50) target = $region17
  $region16: #{_clam_forward_impl.1} parent=0 // pred_region
    %53 = vst [vmem:[#allocation2] sm:$0xff] 0.0
    %54 = vst [vmem:[#allocation2 + $0x8] sm:$0xff] 0.0
    %55 = vst [vmem:[#allocation2 + $0x10] sm:$0xff] 0.0
    %56 = vst [vmem:[#allocation2 + $0x18] sm:$0xff] 0.0
  $region17: #{_clam_forward_impl.1} parent=0 // pred_fallthru
    _
  %v57 = vld [vmem:[%s44] sm:$0xff]
  %v58 = vld [vmem:[%s44 + $0x8] sm:$0xff]
  %v59 = vld [vmem:[%s44 + $0x10] sm:$0xff]
  %v60 = vld [vmem:[%s44 + $0x18] sm:$0xff]
  %v61 = vld [vmem:[%s44 + $0x20] sm:$0xff]
  %v62 = vld [vmem:[%s44 + $0x28] sm:$0xff]
  %v63 = vld [vmem:[%s44 + $0x30] sm:$0xff]
  %v64 = vld [vmem:[%s44 + $0x38] sm:$0xff]
  %v65 = vld [vmem:[%s44 + $0x40] sm:$0xff]
  %v66 = vld [vmem:[%s44 + $0x48] sm:$0xff]
  %v67 = vld [vmem:[%s44 + $0x50] sm:$0xff]
  %v68 = vld [vmem:[%s44 + $0x58] sm:$0xff]
  %v69 = vld [vmem:[%s44 + $0x60] sm:$0xff]
  %v70 = vld [vmem:[%s44 + $0x68] sm:$0xff]
  %v71 = vld [vmem:[%s44 + $0x70] sm:$0xff]
  %v72 = vld [vmem:[%s44 + $0x78] sm:$0xff]
  %v73 = vpack.c.bf16 %v65, %v57
  %v74 = vpack.c.bf16 %v66, %v58
  %v75 = vpack.c.bf16 %v67, %v59
  %v76 = vpack.c.bf16 %v68, %v60
  %v77 = vpack.c.bf16 %v69, %v61
  %v78 = vpack.c.bf16 %v70, %v62
  %v79 = vpack.c.bf16 %v71, %v63
  %v80 = vpack.c.bf16 %v72, %v64
  %v81 = vld [vmem:[%s1] sm:$0xff]
  %v82 = vld [vmem:[%s1 + $0x8] sm:$0xff]
  %v83 = vld [vmem:[%s1 + $0x10] sm:$0xff]
  %v84 = vld [vmem:[%s1 + $0x18] sm:$0xff]
  %v85 = vld [vmem:[%s1 + $0x20] sm:$0xff]
  %v86 = vld [vmem:[%s1 + $0x28] sm:$0xff]
  %v87 = vld [vmem:[%s1 + $0x30] sm:$0xff]
  %v88 = vld [vmem:[%s1 + $0x38] sm:$0xff]
  %v89 = vld [vmem:[%s1 + $0x40] sm:$0xff]
  %v90 = vld [vmem:[%s1 + $0x48] sm:$0xff]
  %v91 = vld [vmem:[%s1 + $0x50] sm:$0xff]
  %v92 = vld [vmem:[%s1 + $0x58] sm:$0xff]
  %v93 = vld [vmem:[%s1 + $0x60] sm:$0xff]
  %v94 = vld [vmem:[%s1 + $0x68] sm:$0xff]
  %v95 = vld [vmem:[%s1 + $0x70] sm:$0xff]
  %v96 = vld [vmem:[%s1 + $0x78] sm:$0xff]
  %v97 = vld [vmem:[%s1 + $0x80] sm:$0xff]
  %v98 = vld [vmem:[%s1 + $0x88] sm:$0xff]
  %v99 = vld [vmem:[%s1 + $0x90] sm:$0xff]
  %v100 = vld [vmem:[%s1 + $0x98] sm:$0xff]
  %v101 = vld [vmem:[%s1 + $0xa0] sm:$0xff]
  %v102 = vld [vmem:[%s1 + $0xa8] sm:$0xff]
  %v103 = vld [vmem:[%s1 + $0xb0] sm:$0xff]
  %v104 = vld [vmem:[%s1 + $0xb8] sm:$0xff]
  %v105 = vld [vmem:[%s1 + $0xc0] sm:$0xff]
  %v106 = vld [vmem:[%s1 + $0xc8] sm:$0xff]
  %v107 = vld [vmem:[%s1 + $0xd0] sm:$0xff]
  %v108 = vld [vmem:[%s1 + $0xd8] sm:$0xff]
  %v109 = vld [vmem:[%s1 + $0xe0] sm:$0xff]
  %v110 = vld [vmem:[%s1 + $0xe8] sm:$0xff]
  %v111 = vld [vmem:[%s1 + $0xf0] sm:$0xff]
  %v112 = vld [vmem:[%s1 + $0xf8] sm:$0xff]
  %v113 = vld [vmem:[%s1 + $0x100] sm:$0xff]
  %v114 = vld [vmem:[%s1 + $0x108] sm:$0xff]
  %v115 = vld [vmem:[%s1 + $0x110] sm:$0xff]
  %v116 = vld [vmem:[%s1 + $0x118] sm:$0xff]
  %v117 = vld [vmem:[%s1 + $0x120] sm:$0xff]
  %v118 = vld [vmem:[%s1 + $0x128] sm:$0xff]
  %v119 = vld [vmem:[%s1 + $0x130] sm:$0xff]
  %v120 = vld [vmem:[%s1 + $0x138] sm:$0xff]
  %v121 = vld [vmem:[%s1 + $0x140] sm:$0xff]
  %v122 = vld [vmem:[%s1 + $0x148] sm:$0xff]
  %v123 = vld [vmem:[%s1 + $0x150] sm:$0xff]
  %v124 = vld [vmem:[%s1 + $0x158] sm:$0xff]
  %v125 = vld [vmem:[%s1 + $0x160] sm:$0xff]
  %v126 = vld [vmem:[%s1 + $0x168] sm:$0xff]
  %v127 = vld [vmem:[%s1 + $0x170] sm:$0xff]
  %v128 = vld [vmem:[%s1 + $0x178] sm:$0xff]
  %v129 = vld [vmem:[%s1 + $0x180] sm:$0xff]
  %v130 = vld [vmem:[%s1 + $0x188] sm:$0xff]
  %v131 = vld [vmem:[%s1 + $0x190] sm:$0xff]
  %v132 = vld [vmem:[%s1 + $0x198] sm:$0xff]
  %v133 = vld [vmem:[%s1 + $0x1a0] sm:$0xff]
  %v134 = vld [vmem:[%s1 + $0x1a8] sm:$0xff]
  %v135 = vld [vmem:[%s1 + $0x1b0] sm:$0xff]
  %v136 = vld [vmem:[%s1 + $0x1b8] sm:$0xff]
  %v137 = vld [vmem:[%s1 + $0x1c0] sm:$0xff]
  %v138 = vld [vmem:[%s1 + $0x1c8] sm:$0xff]
  %v139 = vld [vmem:[%s1 + $0x1d0] sm:$0xff]
  %v140 = vld [vmem:[%s1 + $0x1d8] sm:$0xff]
  %v141 = vld [vmem:[%s1 + $0x1e0] sm:$0xff]
  %v142 = vld [vmem:[%s1 + $0x1e8] sm:$0xff]
  %v143 = vld [vmem:[%s1 + $0x1f0] sm:$0xff]
  %v144 = vld [vmem:[%s1 + $0x1f8] sm:$0xff]
  %v145 = vld [vmem:[%s1 + $0x200] sm:$0xff]
  %v146 = vld [vmem:[%s1 + $0x208] sm:$0xff]
  %v147 = vld [vmem:[%s1 + $0x210] sm:$0xff]
  %v148 = vld [vmem:[%s1 + $0x218] sm:$0xff]
  %v149 = vld [vmem:[%s1 + $0x220] sm:$0xff]
  %v150 = vld [vmem:[%s1 + $0x228] sm:$0xff]
  %v151 = vld [vmem:[%s1 + $0x230] sm:$0xff]
  %v152 = vld [vmem:[%s1 + $0x238] sm:$0xff]
  %v153 = vld [vmem:[%s1 + $0x240] sm:$0xff]
  %v154 = vld [vmem:[%s1 + $0x248] sm:$0xff]
  %v155 = vld [vmem:[%s1 + $0x250] sm:$0xff]
  %v156 = vld [vmem:[%s1 + $0x258] sm:$0xff]
  %v157 = vld [vmem:[%s1 + $0x260] sm:$0xff]
  %v158 = vld [vmem:[%s1 + $0x268] sm:$0xff]
  %v159 = vld [vmem:[%s1 + $0x270] sm:$0xff]
  %v160 = vld [vmem:[%s1 + $0x278] sm:$0xff]
  %v161 = vld [vmem:[%s1 + $0x280] sm:$0xff]
  %v162 = vld [vmem:[%s1 + $0x288] sm:$0xff]
  %v163 = vld [vmem:[%s1 + $0x290] sm:$0xff]
  %v164 = vld [vmem:[%s1 + $0x298] sm:$0xff]
  %v165 = vld [vmem:[%s1 + $0x2a0] sm:$0xff]
  %v166 = vld [vmem:[%s1 + $0x2a8] sm:$0xff]
  %v167 = vld [vmem:[%s1 + $0x2b0] sm:$0xff]
  %v168 = vld [vmem:[%s1 + $0x2b8] sm:$0xff]
  %v169 = vld [vmem:[%s1 + $0x2c0] sm:$0xff]
  %v170 = vld [vmem:[%s1 + $0x2c8] sm:$0xff]
  %v171 = vld [vmem:[%s1 + $0x2d0] sm:$0xff]
  %v172 = vld [vmem:[%s1 + $0x2d8] sm:$0xff]
  %v173 = vld [vmem:[%s1 + $0x2e0] sm:$0xff]
  %v174 = vld [vmem:[%s1 + $0x2e8] sm:$0xff]
  %v175 = vld [vmem:[%s1 + $0x2f0] sm:$0xff]
  %v176 = vld [vmem:[%s1 + $0x2f8] sm:$0xff]
  %v177 = vld [vmem:[%s1 + $0x300] sm:$0xff]
  %v178 = vld [vmem:[%s1 + $0x308] sm:$0xff]
  %v179 = vld [vmem:[%s1 + $0x310] sm:$0xff]
  %v180 = vld [vmem:[%s1 + $0x318] sm:$0xff]
  %v181 = vld [vmem:[%s1 + $0x320] sm:$0xff]
  %v182 = vld [vmem:[%s1 + $0x328] sm:$0xff]
  %v183 = vld [vmem:[%s1 + $0x330] sm:$0xff]
  %v184 = vld [vmem:[%s1 + $0x338] sm:$0xff]
  %v185 = vld [vmem:[%s1 + $0x340] sm:$0xff]
  %v186 = vld [vmem:[%s1 + $0x348] sm:$0xff]
  %v187 = vld [vmem:[%s1 + $0x350] sm:$0xff]
  %v188 = vld [vmem:[%s1 + $0x358] sm:$0xff]
  %v189 = vld [vmem:[%s1 + $0x360] sm:$0xff]
  %v190 = vld [vmem:[%s1 + $0x368] sm:$0xff]
  %v191 = vld [vmem:[%s1 + $0x370] sm:$0xff]
  %v192 = vld [vmem:[%s1 + $0x378] sm:$0xff]
  %v193 = vld [vmem:[%s1 + $0x380] sm:$0xff]
  %v194 = vld [vmem:[%s1 + $0x388] sm:$0xff]
  %v195 = vld [vmem:[%s1 + $0x390] sm:$0xff]
  %v196 = vld [vmem:[%s1 + $0x398] sm:$0xff]
  %v197 = vld [vmem:[%s1 + $0x3a0] sm:$0xff]
  %v198 = vld [vmem:[%s1 + $0x3a8] sm:$0xff]
  %v199 = vld [vmem:[%s1 + $0x3b0] sm:$0xff]
  %v200 = vld [vmem:[%s1 + $0x3b8] sm:$0xff]
  %v201 = vld [vmem:[%s1 + $0x3c0] sm:$0xff]
  %v202 = vld [vmem:[%s1 + $0x3c8] sm:$0xff]
  %v203 = vld [vmem:[%s1 + $0x3d0] sm:$0xff]
  %v204 = vld [vmem:[%s1 + $0x3d8] sm:$0xff]
  %v205 = vld [vmem:[%s1 + $0x3e0] sm:$0xff]
  %v206 = vld [vmem:[%s1 + $0x3e8] sm:$0xff]
  %v207 = vld [vmem:[%s1 + $0x3f0] sm:$0xff]
  %v208 = vld [vmem:[%s1 + $0x3f8] sm:$0xff]
  %v209 = vld [vmem:[%s1 + $0x400] sm:$0xff]
  %v210 = vld [vmem:[%s1 + $0x408] sm:$0xff]
  %v211 = vld [vmem:[%s1 + $0x410] sm:$0xff]
  %v212 = vld [vmem:[%s1 + $0x418] sm:$0xff]
  %v213 = vld [vmem:[%s1 + $0x420] sm:$0xff]
  %v214 = vld [vmem:[%s1 + $0x428] sm:$0xff]
  %v215 = vld [vmem:[%s1 + $0x430] sm:$0xff]
  %v216 = vld [vmem:[%s1 + $0x438] sm:$0xff]
  %v217 = vld [vmem:[%s1 + $0x440] sm:$0xff]
  %v218 = vld [vmem:[%s1 + $0x448] sm:$0xff]
  %v219 = vld [vmem:[%s1 + $0x450] sm:$0xff]
  %v220 = vld [vmem:[%s1 + $0x458] sm:$0xff]
  %v221 = vld [vmem:[%s1 + $0x460] sm:$0xff]
  %v222 = vld [vmem:[%s1 + $0x468] sm:$0xff]
  %v223 = vld [vmem:[%s1 + $0x470] sm:$0xff]
  %v224 = vld [vmem:[%s1 + $0x478] sm:$0xff]
  %v225 = vld [vmem:[%s1 + $0x480] sm:$0xff]
  %v226 = vld [vmem:[%s1 + $0x488] sm:$0xff]
  %v227 = vld [vmem:[%s1 + $0x490] sm:$0xff]
  %v228 = vld [vmem:[%s1 + $0x498] sm:$0xff]
  %v229 = vld [vmem:[%s1 + $0x4a0] sm:$0xff]
  %v230 = vld [vmem:[%s1 + $0x4a8] sm:$0xff]
  %v231 = vld [vmem:[%s1 + $0x4b0] sm:$0xff]
  %v232 = vld [vmem:[%s1 + $0x4b8] sm:$0xff]
  %v233 = vld [vmem:[%s1 + $0x4c0] sm:$0xff]
  %v234 = vld [vmem:[%s1 + $0x4c8] sm:$0xff]
  %v235 = vld [vmem:[%s1 + $0x4d0] sm:$0xff]
  %v236 = vld [vmem:[%s1 + $0x4d8] sm:$0xff]
  %v237 = vld [vmem:[%s1 + $0x4e0] sm:$0xff]
  %v238 = vld [vmem:[%s1 + $0x4e8] sm:$0xff]
  %v239 = vld [vmem:[%s1 + $0x4f0] sm:$0xff]
  %v240 = vld [vmem:[%s1 + $0x4f8] sm:$0xff]
  %v241 = vld [vmem:[%s1 + $0x500] sm:$0xff]
  %v242 = vld [vmem:[%s1 + $0x508] sm:$0xff]
  %v243 = vld [vmem:[%s1 + $0x510] sm:$0xff]
  %v244 = vld [vmem:[%s1 + $0x518] sm:$0xff]
  %v245 = vld [vmem:[%s1 + $0x520] sm:$0xff]
  %v246 = vld [vmem:[%s1 + $0x528] sm:$0xff]
  %v247 = vld [vmem:[%s1 + $0x530] sm:$0xff]
  %v248 = vld [vmem:[%s1 + $0x538] sm:$0xff]
  %v249 = vld [vmem:[%s1 + $0x540] sm:$0xff]
  %v250 = vld [vmem:[%s1 + $0x548] sm:$0xff]
  %v251 = vld [vmem:[%s1 + $0x550] sm:$0xff]
  %v252 = vld [vmem:[%s1 + $0x558] sm:$0xff]
  %v253 = vld [vmem:[%s1 + $0x560] sm:$0xff]
  %v254 = vld [vmem:[%s1 + $0x568] sm:$0xff]
  %v255 = vld [vmem:[%s1 + $0x570] sm:$0xff]
  %v256 = vld [vmem:[%s1 + $0x578] sm:$0xff]
  %v257 = vld [vmem:[%s1 + $0x580] sm:$0xff]
  %v258 = vld [vmem:[%s1 + $0x588] sm:$0xff]
  %v259 = vld [vmem:[%s1 + $0x590] sm:$0xff]
  %v260 = vld [vmem:[%s1 + $0x598] sm:$0xff]
  %v261 = vld [vmem:[%s1 + $0x5a0] sm:$0xff]
  %v262 = vld [vmem:[%s1 + $0x5a8] sm:$0xff]
  %v263 = vld [vmem:[%s1 + $0x5b0] sm:$0xff]
  %v264 = vld [vmem:[%s1 + $0x5b8] sm:$0xff]
  %v265 = vld [vmem:[%s1 + $0x5c0] sm:$0xff]
  %v266 = vld [vmem:[%s1 + $0x5c8] sm:$0xff]
  %v267 = vld [vmem:[%s1 + $0x5d0] sm:$0xff]
  %v268 = vld [vmem:[%s1 + $0x5d8] sm:$0xff]
  %v269 = vld [vmem:[%s1 + $0x5e0] sm:$0xff]
  %v270 = vld [vmem:[%s1 + $0x5e8] sm:$0xff]
  %v271 = vld [vmem:[%s1 + $0x5f0] sm:$0xff]
  %v272 = vld [vmem:[%s1 + $0x5f8] sm:$0xff]
  %v273 = vld [vmem:[%s1 + $0x600] sm:$0xff]
  %v274 = vld [vmem:[%s1 + $0x608] sm:$0xff]
  %v275 = vld [vmem:[%s1 + $0x610] sm:$0xff]
  %v276 = vld [vmem:[%s1 + $0x618] sm:$0xff]
  %v277 = vld [vmem:[%s1 + $0x620] sm:$0xff]
  %v278 = vld [vmem:[%s1 + $0x628] sm:$0xff]
  %v279 = vld [vmem:[%s1 + $0x630] sm:$0xff]
  %v280 = vld [vmem:[%s1 + $0x638] sm:$0xff]
  %v281 = vld [vmem:[%s1 + $0x640] sm:$0xff]
  %v282 = vld [vmem:[%s1 + $0x648] sm:$0xff]
  %v283 = vld [vmem:[%s1 + $0x650] sm:$0xff]
  %v284 = vld [vmem:[%s1 + $0x658] sm:$0xff]
  %v285 = vld [vmem:[%s1 + $0x660] sm:$0xff]
  %v286 = vld [vmem:[%s1 + $0x668] sm:$0xff]
  %v287 = vld [vmem:[%s1 + $0x670] sm:$0xff]
  %v288 = vld [vmem:[%s1 + $0x678] sm:$0xff]
  %v289 = vld [vmem:[%s1 + $0x680] sm:$0xff]
  %v290 = vld [vmem:[%s1 + $0x688] sm:$0xff]
  %v291 = vld [vmem:[%s1 + $0x690] sm:$0xff]
  %v292 = vld [vmem:[%s1 + $0x698] sm:$0xff]
  %v293 = vld [vmem:[%s1 + $0x6a0] sm:$0xff]
  %v294 = vld [vmem:[%s1 + $0x6a8] sm:$0xff]
  %v295 = vld [vmem:[%s1 + $0x6b0] sm:$0xff]
  %v296 = vld [vmem:[%s1 + $0x6b8] sm:$0xff]
  %v297 = vld [vmem:[%s1 + $0x6c0] sm:$0xff]
  %v298 = vld [vmem:[%s1 + $0x6c8] sm:$0xff]
  %v299 = vld [vmem:[%s1 + $0x6d0] sm:$0xff]
  %v300 = vld [vmem:[%s1 + $0x6d8] sm:$0xff]
  %v301 = vld [vmem:[%s1 + $0x6e0] sm:$0xff]
  %v302 = vld [vmem:[%s1 + $0x6e8] sm:$0xff]
  %v303 = vld [vmem:[%s1 + $0x6f0] sm:$0xff]
  %v304 = vld [vmem:[%s1 + $0x6f8] sm:$0xff]
  %v305 = vld [vmem:[%s1 + $0x700] sm:$0xff]
  %v306 = vld [vmem:[%s1 + $0x708] sm:$0xff]
  %v307 = vld [vmem:[%s1 + $0x710] sm:$0xff]
  %v308 = vld [vmem:[%s1 + $0x718] sm:$0xff]
  %v309 = vld [vmem:[%s1 + $0x720] sm:$0xff]
  %v310 = vld [vmem:[%s1 + $0x728] sm:$0xff]
  %v311 = vld [vmem:[%s1 + $0x730] sm:$0xff]
  %v312 = vld [vmem:[%s1 + $0x738] sm:$0xff]
  %v313 = vld [vmem:[%s1 + $0x740] sm:$0xff]
  %v314 = vld [vmem:[%s1 + $0x748] sm:$0xff]
  %v315 = vld [vmem:[%s1 + $0x750] sm:$0xff]
  %v316 = vld [vmem:[%s1 + $0x758] sm:$0xff]
  %v317 = vld [vmem:[%s1 + $0x760] sm:$0xff]
  %v318 = vld [vmem:[%s1 + $0x768] sm:$0xff]
  %v319 = vld [vmem:[%s1 + $0x770] sm:$0xff]
  %v320 = vld [vmem:[%s1 + $0x778] sm:$0xff]
  %v321 = vld [vmem:[%s1 + $0x780] sm:$0xff]
  %v322 = vld [vmem:[%s1 + $0x788] sm:$0xff]
  %v323 = vld [vmem:[%s1 + $0x790] sm:$0xff]
  %v324 = vld [vmem:[%s1 + $0x798] sm:$0xff]
  %v325 = vld [vmem:[%s1 + $0x7a0] sm:$0xff]
  %v326 = vld [vmem:[%s1 + $0x7a8] sm:$0xff]
  %v327 = vld [vmem:[%s1 + $0x7b0] sm:$0xff]
  %v328 = vld [vmem:[%s1 + $0x7b8] sm:$0xff]
  %v329 = vld [vmem:[%s1 + $0x7c0] sm:$0xff]
  %v330 = vld [vmem:[%s1 + $0x7c8] sm:$0xff]
  %v331 = vld [vmem:[%s1 + $0x7d0] sm:$0xff]
  %v332 = vld [vmem:[%s1 + $0x7d8] sm:$0xff]
  %v333 = vld [vmem:[%s1 + $0x7e0] sm:$0xff]
  %v334 = vld [vmem:[%s1 + $0x7e8] sm:$0xff]
  %v335 = vld [vmem:[%s1 + $0x7f0] sm:$0xff]
  %v336 = vld [vmem:[%s1 + $0x7f8] sm:$0xff]
  %v337 = vld [vmem:[%s2] sm:$0xf]
  %v339 = vlaneseq
  %v340 = vshrl.u32 %v339, 7
  %v341 = vsub.s32 0, %v340
  %v342 = vrot.slane %v337, %v341
  %v343 = vlaneseq
  %v344 = vshrl.u32 %v343, 7
  %v345 = vsub.s32 1, %v344
  %v346 = vrot.slane %v337, %v345
  %v347 = vlaneseq
  %v348 = vshrl.u32 %v347, 7
  %v349 = vsub.s32 2, %v348
  %v350 = vrot.slane %v337, %v349
  %v351 = vlaneseq
  %v352 = vshrl.u32 %v351, 7
  %v353 = vsub.s32 3, %v352
  %v354 = vrot.slane %v337, %v353
  %v615 = vunpack.c.l.b16 %v81
  %v616 = vunpack.c.h.b16 %v81
  %v617 = vunpack.c.l.b16 %v82
  %v618 = vunpack.c.h.b16 %v82
  %v619 = vunpack.c.l.b16 %v83
  %v620 = vunpack.c.h.b16 %v83
  %v621 = vunpack.c.l.b16 %v84
  %v622 = vunpack.c.h.b16 %v84
  %v623 = vunpack.c.l.b16 %v85
  %v624 = vunpack.c.h.b16 %v85
  %v625 = vunpack.c.l.b16 %v86
  %v626 = vunpack.c.h.b16 %v86
  %v627 = vunpack.c.l.b16 %v87
  %v628 = vunpack.c.h.b16 %v87
  %v629 = vunpack.c.l.b16 %v88
  %v630 = vunpack.c.h.b16 %v88
  %v631 = vunpack.c.l.b16 %v89
  %v632 = vunpack.c.h.b16 %v89
  %v633 = vunpack.c.l.b16 %v90
  %v634 = vunpack.c.h.b16 %v90
  %v635 = vunpack.c.l.b16 %v91
  %v636 = vunpack.c.h.b16 %v91
  %v637 = vunpack.c.l.b16 %v92
  %v638 = vunpack.c.h.b16 %v92
  %v639 = vunpack.c.l.b16 %v93
  %v640 = vunpack.c.h.b16 %v93
  %v641 = vunpack.c.l.b16 %v94
  %v642 = vunpack.c.h.b16 %v94
  %v643 = vunpack.c.l.b16 %v95
  %v644 = vunpack.c.h.b16 %v95
  %v645 = vunpack.c.l.b16 %v96
  %v646 = vunpack.c.h.b16 %v96
  %v647 = vunpack.c.l.b16 %v97
  %v648 = vunpack.c.h.b16 %v97
  %v649 = vunpack.c.l.b16 %v98
  %v650 = vunpack.c.h.b16 %v98
  %v651 = vunpack.c.l.b16 %v99
  %v652 = vunpack.c.h.b16 %v99
  %v653 = vunpack.c.l.b16 %v100
  %v654 = vunpack.c.h.b16 %v100
  %v655 = vunpack.c.l.b16 %v101
  %v656 = vunpack.c.h.b16 %v101
  %v657 = vunpack.c.l.b16 %v102
  %v658 = vunpack.c.h.b16 %v102
  %v659 = vunpack.c.l.b16 %v103
  %v660 = vunpack.c.h.b16 %v103
  %v661 = vunpack.c.l.b16 %v104
  %v662 = vunpack.c.h.b16 %v104
  %v663 = vunpack.c.l.b16 %v105
  %v664 = vunpack.c.h.b16 %v105
  %v665 = vunpack.c.l.b16 %v106
  %v666 = vunpack.c.h.b16 %v106
  %v667 = vunpack.c.l.b16 %v107
  %v668 = vunpack.c.h.b16 %v107
  %v669 = vunpack.c.l.b16 %v108
  %v670 = vunpack.c.h.b16 %v108
  %v671 = vunpack.c.l.b16 %v109
  %v672 = vunpack.c.h.b16 %v109
  %v673 = vunpack.c.l.b16 %v110
  %v674 = vunpack.c.h.b16 %v110
  %v675 = vunpack.c.l.b16 %v111
  %v676 = vunpack.c.h.b16 %v111
  %v677 = vunpack.c.l.b16 %v112
  %v678 = vunpack.c.h.b16 %v112
  %v679 = vunpack.c.l.b16 %v113
  %v680 = vunpack.c.h.b16 %v113
  %v681 = vunpack.c.l.b16 %v114
  %v682 = vunpack.c.h.b16 %v114
  %v683 = vunpack.c.l.b16 %v115
  %v684 = vunpack.c.h.b16 %v115
  %v685 = vunpack.c.l.b16 %v116
  %v686 = vunpack.c.h.b16 %v116
  %v687 = vunpack.c.l.b16 %v117
  %v688 = vunpack.c.h.b16 %v117
  %v689 = vunpack.c.l.b16 %v118
  %v690 = vunpack.c.h.b16 %v118
  %v691 = vunpack.c.l.b16 %v119
  %v692 = vunpack.c.h.b16 %v119
  %v693 = vunpack.c.l.b16 %v120
  %v694 = vunpack.c.h.b16 %v120
  %v695 = vunpack.c.l.b16 %v121
  %v696 = vunpack.c.h.b16 %v121
  %v697 = vunpack.c.l.b16 %v122
  %v698 = vunpack.c.h.b16 %v122
  %v699 = vunpack.c.l.b16 %v123
  %v700 = vunpack.c.h.b16 %v123
  %v701 = vunpack.c.l.b16 %v124
  %v702 = vunpack.c.h.b16 %v124
  %v703 = vunpack.c.l.b16 %v125
  %v704 = vunpack.c.h.b16 %v125
  %v705 = vunpack.c.l.b16 %v126
  %v706 = vunpack.c.h.b16 %v126
  %v707 = vunpack.c.l.b16 %v127
  %v708 = vunpack.c.h.b16 %v127
  %v709 = vunpack.c.l.b16 %v128
  %v710 = vunpack.c.h.b16 %v128
  %v711 = vunpack.c.l.b16 %v129
  %v712 = vunpack.c.h.b16 %v129
  %v713 = vunpack.c.l.b16 %v130
  %v714 = vunpack.c.h.b16 %v130
  %v715 = vunpack.c.l.b16 %v131
  %v716 = vunpack.c.h.b16 %v131
  %v717 = vunpack.c.l.b16 %v132
  %v718 = vunpack.c.h.b16 %v132
  %v719 = vunpack.c.l.b16 %v133
  %v720 = vunpack.c.h.b16 %v133
  %v721 = vunpack.c.l.b16 %v134
  %v722 = vunpack.c.h.b16 %v134
  %v723 = vunpack.c.l.b16 %v135
  %v724 = vunpack.c.h.b16 %v135
  %v725 = vunpack.c.l.b16 %v136
  %v726 = vunpack.c.h.b16 %v136
  %v727 = vunpack.c.l.b16 %v137
  %v728 = vunpack.c.h.b16 %v137
  %v729 = vunpack.c.l.b16 %v138
  %v730 = vunpack.c.h.b16 %v138
  %v731 = vunpack.c.l.b16 %v139
  %v732 = vunpack.c.h.b16 %v139
  %v733 = vunpack.c.l.b16 %v140
  %v734 = vunpack.c.h.b16 %v140
  %v735 = vunpack.c.l.b16 %v141
  %v736 = vunpack.c.h.b16 %v141
  %v737 = vunpack.c.l.b16 %v142
  %v738 = vunpack.c.h.b16 %v142
  %v739 = vunpack.c.l.b16 %v143
  %v740 = vunpack.c.h.b16 %v143
  %v741 = vunpack.c.l.b16 %v144
  %v742 = vunpack.c.h.b16 %v144
  %v743 = vunpack.c.l.b16 %v145
  %v744 = vunpack.c.h.b16 %v145
  %v745 = vunpack.c.l.b16 %v146
  %v746 = vunpack.c.h.b16 %v146
  %v747 = vunpack.c.l.b16 %v147
  %v748 = vunpack.c.h.b16 %v147
  %v749 = vunpack.c.l.b16 %v148
  %v750 = vunpack.c.h.b16 %v148
  %v751 = vunpack.c.l.b16 %v149
  %v752 = vunpack.c.h.b16 %v149
  %v753 = vunpack.c.l.b16 %v150
  %v754 = vunpack.c.h.b16 %v150
  %v755 = vunpack.c.l.b16 %v151
  %v756 = vunpack.c.h.b16 %v151
  %v757 = vunpack.c.l.b16 %v152
  %v758 = vunpack.c.h.b16 %v152
  %v759 = vunpack.c.l.b16 %v153
  %v760 = vunpack.c.h.b16 %v153
  %v761 = vunpack.c.l.b16 %v154
  %v762 = vunpack.c.h.b16 %v154
  %v763 = vunpack.c.l.b16 %v155
  %v764 = vunpack.c.h.b16 %v155
  %v765 = vunpack.c.l.b16 %v156
  %v766 = vunpack.c.h.b16 %v156
  %v767 = vunpack.c.l.b16 %v157
  %v768 = vunpack.c.h.b16 %v157
  %v769 = vunpack.c.l.b16 %v158
  %v770 = vunpack.c.h.b16 %v158
  %v771 = vunpack.c.l.b16 %v159
  %v772 = vunpack.c.h.b16 %v159
  %v773 = vunpack.c.l.b16 %v160
  %v774 = vunpack.c.h.b16 %v160
  %v775 = vunpack.c.l.b16 %v161
  %v776 = vunpack.c.h.b16 %v161
  %v777 = vunpack.c.l.b16 %v162
  %v778 = vunpack.c.h.b16 %v162
  %v779 = vunpack.c.l.b16 %v163
  %v780 = vunpack.c.h.b16 %v163
  %v781 = vunpack.c.l.b16 %v164
  %v782 = vunpack.c.h.b16 %v164
  %v783 = vunpack.c.l.b16 %v165
  %v784 = vunpack.c.h.b16 %v165
  %v785 = vunpack.c.l.b16 %v166
  %v786 = vunpack.c.h.b16 %v166
  %v787 = vunpack.c.l.b16 %v167
  %v788 = vunpack.c.h.b16 %v167
  %v789 = vunpack.c.l.b16 %v168
  %v790 = vunpack.c.h.b16 %v168
  %v791 = vunpack.c.l.b16 %v169
  %v792 = vunpack.c.h.b16 %v169
  %v793 = vunpack.c.l.b16 %v170
  %v794 = vunpack.c.h.b16 %v170
  %v795 = vunpack.c.l.b16 %v171
  %v796 = vunpack.c.h.b16 %v171
  %v797 = vunpack.c.l.b16 %v172
  %v798 = vunpack.c.h.b16 %v172
  %v799 = vunpack.c.l.b16 %v173
  %v800 = vunpack.c.h.b16 %v173
  %v801 = vunpack.c.l.b16 %v174
  %v802 = vunpack.c.h.b16 %v174
  %v803 = vunpack.c.l.b16 %v175
  %v804 = vunpack.c.h.b16 %v175
  %v805 = vunpack.c.l.b16 %v176
  %v806 = vunpack.c.h.b16 %v176
  %v807 = vunpack.c.l.b16 %v177
  %v808 = vunpack.c.h.b16 %v177
  %v809 = vunpack.c.l.b16 %v178
  %v810 = vunpack.c.h.b16 %v178
  %v811 = vunpack.c.l.b16 %v179
  %v812 = vunpack.c.h.b16 %v179
  %v813 = vunpack.c.l.b16 %v180
  %v814 = vunpack.c.h.b16 %v180
  %v815 = vunpack.c.l.b16 %v181
  %v816 = vunpack.c.h.b16 %v181
  %v817 = vunpack.c.l.b16 %v182
  %v818 = vunpack.c.h.b16 %v182
  %v819 = vunpack.c.l.b16 %v183
  %v820 = vunpack.c.h.b16 %v183
  %v821 = vunpack.c.l.b16 %v184
  %v822 = vunpack.c.h.b16 %v184
  %v823 = vunpack.c.l.b16 %v185
  %v824 = vunpack.c.h.b16 %v185
  %v825 = vunpack.c.l.b16 %v186
  %v826 = vunpack.c.h.b16 %v186
  %v827 = vunpack.c.l.b16 %v187
  %v828 = vunpack.c.h.b16 %v187
  %v829 = vunpack.c.l.b16 %v188
  %v830 = vunpack.c.h.b16 %v188
  %v831 = vunpack.c.l.b16 %v189
  %v832 = vunpack.c.h.b16 %v189
  %v833 = vunpack.c.l.b16 %v190
  %v834 = vunpack.c.h.b16 %v190
  %v835 = vunpack.c.l.b16 %v191
  %v836 = vunpack.c.h.b16 %v191
  %v837 = vunpack.c.l.b16 %v192
  %v838 = vunpack.c.h.b16 %v192
  %v839 = vunpack.c.l.b16 %v193
  %v840 = vunpack.c.h.b16 %v193
  %v841 = vunpack.c.l.b16 %v194
  %v842 = vunpack.c.h.b16 %v194
  %v843 = vunpack.c.l.b16 %v195
  %v844 = vunpack.c.h.b16 %v195
  %v845 = vunpack.c.l.b16 %v196
  %v846 = vunpack.c.h.b16 %v196
  %v847 = vunpack.c.l.b16 %v197
  %v848 = vunpack.c.h.b16 %v197
  %v849 = vunpack.c.l.b16 %v198
  %v850 = vunpack.c.h.b16 %v198
  %v851 = vunpack.c.l.b16 %v199
  %v852 = vunpack.c.h.b16 %v199
  %v853 = vunpack.c.l.b16 %v200
  %v854 = vunpack.c.h.b16 %v200
  %v855 = vunpack.c.l.b16 %v201
  %v856 = vunpack.c.h.b16 %v201
  %v857 = vunpack.c.l.b16 %v202
  %v858 = vunpack.c.h.b16 %v202
  %v859 = vunpack.c.l.b16 %v203
  %v860 = vunpack.c.h.b16 %v203
  %v861 = vunpack.c.l.b16 %v204
  %v862 = vunpack.c.h.b16 %v204
  %v863 = vunpack.c.l.b16 %v205
  %v864 = vunpack.c.h.b16 %v205
  %v865 = vunpack.c.l.b16 %v206
  %v866 = vunpack.c.h.b16 %v206
  %v867 = vunpack.c.l.b16 %v207
  %v868 = vunpack.c.h.b16 %v207
  %v869 = vunpack.c.l.b16 %v208
  %v870 = vunpack.c.h.b16 %v208
  %v871 = vunpack.c.l.b16 %v209
  %v872 = vunpack.c.h.b16 %v209
  %v873 = vunpack.c.l.b16 %v210
  %v874 = vunpack.c.h.b16 %v210
  %v875 = vunpack.c.l.b16 %v211
  %v876 = vunpack.c.h.b16 %v211
  %v877 = vunpack.c.l.b16 %v212
  %v878 = vunpack.c.h.b16 %v212
  %v879 = vunpack.c.l.b16 %v213
  %v880 = vunpack.c.h.b16 %v213
  %v881 = vunpack.c.l.b16 %v214
  %v882 = vunpack.c.h.b16 %v214
  %v883 = vunpack.c.l.b16 %v215
  %v884 = vunpack.c.h.b16 %v215
  %v885 = vunpack.c.l.b16 %v216
  %v886 = vunpack.c.h.b16 %v216
  %v887 = vunpack.c.l.b16 %v217
  %v888 = vunpack.c.h.b16 %v217
  %v889 = vunpack.c.l.b16 %v218
  %v890 = vunpack.c.h.b16 %v218
  %v891 = vunpack.c.l.b16 %v219
  %v892 = vunpack.c.h.b16 %v219
  %v893 = vunpack.c.l.b16 %v220
  %v894 = vunpack.c.h.b16 %v220
  %v895 = vunpack.c.l.b16 %v221
  %v896 = vunpack.c.h.b16 %v221
  %v897 = vunpack.c.l.b16 %v222
  %v898 = vunpack.c.h.b16 %v222
  %v899 = vunpack.c.l.b16 %v223
  %v900 = vunpack.c.h.b16 %v223
  %v901 = vunpack.c.l.b16 %v224
  %v902 = vunpack.c.h.b16 %v224
  %v903 = vunpack.c.l.b16 %v225
  %v904 = vunpack.c.h.b16 %v225
  %v905 = vunpack.c.l.b16 %v226
  %v906 = vunpack.c.h.b16 %v226
  %v907 = vunpack.c.l.b16 %v227
  %v908 = vunpack.c.h.b16 %v227
  %v909 = vunpack.c.l.b16 %v228
  %v910 = vunpack.c.h.b16 %v228
  %v911 = vunpack.c.l.b16 %v229
  %v912 = vunpack.c.h.b16 %v229
  %v913 = vunpack.c.l.b16 %v230
  %v914 = vunpack.c.h.b16 %v230
  %v915 = vunpack.c.l.b16 %v231
  %v916 = vunpack.c.h.b16 %v231
  %v917 = vunpack.c.l.b16 %v232
  %v918 = vunpack.c.h.b16 %v232
  %v919 = vunpack.c.l.b16 %v233
  %v920 = vunpack.c.h.b16 %v233
  %v921 = vunpack.c.l.b16 %v234
  %v922 = vunpack.c.h.b16 %v234
  %v923 = vunpack.c.l.b16 %v235
  %v924 = vunpack.c.h.b16 %v235
  %v925 = vunpack.c.l.b16 %v236
  %v926 = vunpack.c.h.b16 %v236
  %v927 = vunpack.c.l.b16 %v237
  %v928 = vunpack.c.h.b16 %v237
  %v929 = vunpack.c.l.b16 %v238
  %v930 = vunpack.c.h.b16 %v238
  %v931 = vunpack.c.l.b16 %v239
  %v932 = vunpack.c.h.b16 %v239
  %v933 = vunpack.c.l.b16 %v240
  %v934 = vunpack.c.h.b16 %v240
  %v935 = vunpack.c.l.b16 %v241
  %v936 = vunpack.c.h.b16 %v241
  %v937 = vunpack.c.l.b16 %v242
  %v938 = vunpack.c.h.b16 %v242
  %v939 = vunpack.c.l.b16 %v243
  %v940 = vunpack.c.h.b16 %v243
  %v941 = vunpack.c.l.b16 %v244
  %v942 = vunpack.c.h.b16 %v244
  %v943 = vunpack.c.l.b16 %v245
  %v944 = vunpack.c.h.b16 %v245
  %v945 = vunpack.c.l.b16 %v246
  %v946 = vunpack.c.h.b16 %v246
  %v947 = vunpack.c.l.b16 %v247
  %v948 = vunpack.c.h.b16 %v247
  %v949 = vunpack.c.l.b16 %v248
  %v950 = vunpack.c.h.b16 %v248
  %v951 = vunpack.c.l.b16 %v249
  %v952 = vunpack.c.h.b16 %v249
  %v953 = vunpack.c.l.b16 %v250
  %v954 = vunpack.c.h.b16 %v250
  %v955 = vunpack.c.l.b16 %v251
  %v956 = vunpack.c.h.b16 %v251
  %v957 = vunpack.c.l.b16 %v252
  %v958 = vunpack.c.h.b16 %v252
  %v959 = vunpack.c.l.b16 %v253
  %v960 = vunpack.c.h.b16 %v253
  %v961 = vunpack.c.l.b16 %v254
  %v962 = vunpack.c.h.b16 %v254
  %v963 = vunpack.c.l.b16 %v255
  %v964 = vunpack.c.h.b16 %v255
  %v965 = vunpack.c.l.b16 %v256
  %v966 = vunpack.c.h.b16 %v256
  %v967 = vunpack.c.l.b16 %v257
  %v968 = vunpack.c.h.b16 %v257
  %v969 = vunpack.c.l.b16 %v258
  %v970 = vunpack.c.h.b16 %v258
  %v971 = vunpack.c.l.b16 %v259
  %v972 = vunpack.c.h.b16 %v259
  %v973 = vunpack.c.l.b16 %v260
  %v974 = vunpack.c.h.b16 %v260
  %v975 = vunpack.c.l.b16 %v261
  %v976 = vunpack.c.h.b16 %v261
  %v977 = vunpack.c.l.b16 %v262
  %v978 = vunpack.c.h.b16 %v262
  %v979 = vunpack.c.l.b16 %v263
  %v980 = vunpack.c.h.b16 %v263
  %v981 = vunpack.c.l.b16 %v264
  %v982 = vunpack.c.h.b16 %v264
  %v983 = vunpack.c.l.b16 %v265
  %v984 = vunpack.c.h.b16 %v265
  %v985 = vunpack.c.l.b16 %v266
  %v986 = vunpack.c.h.b16 %v266
  %v987 = vunpack.c.l.b16 %v267
  %v988 = vunpack.c.h.b16 %v267
  %v989 = vunpack.c.l.b16 %v268
  %v990 = vunpack.c.h.b16 %v268
  %v991 = vunpack.c.l.b16 %v269
  %v992 = vunpack.c.h.b16 %v269
  %v993 = vunpack.c.l.b16 %v270
  %v994 = vunpack.c.h.b16 %v270
  %v995 = vunpack.c.l.b16 %v271
  %v996 = vunpack.c.h.b16 %v271
  %v997 = vunpack.c.l.b16 %v272
  %v998 = vunpack.c.h.b16 %v272
  %v999 = vunpack.c.l.b16 %v273
  %v1000 = vunpack.c.h.b16 %v273
  %v1001 = vunpack.c.l.b16 %v274
  %v1002 = vunpack.c.h.b16 %v274
  %v1003 = vunpack.c.l.b16 %v275
  %v1004 = vunpack.c.h.b16 %v275
  %v1005 = vunpack.c.l.b16 %v276
  %v1006 = vunpack.c.h.b16 %v276
  %v1007 = vunpack.c.l.b16 %v277
  %v1008 = vunpack.c.h.b16 %v277
  %v1009 = vunpack.c.l.b16 %v278
  %v1010 = vunpack.c.h.b16 %v278
  %v1011 = vunpack.c.l.b16 %v279
  %v1012 = vunpack.c.h.b16 %v279
  %v1013 = vunpack.c.l.b16 %v280
  %v1014 = vunpack.c.h.b16 %v280
  %v1015 = vunpack.c.l.b16 %v281
  %v1016 = vunpack.c.h.b16 %v281
  %v1017 = vunpack.c.l.b16 %v282
  %v1018 = vunpack.c.h.b16 %v282
  %v1019 = vunpack.c.l.b16 %v283
  %v1020 = vunpack.c.h.b16 %v283
  %v1021 = vunpack.c.l.b16 %v284
  %v1022 = vunpack.c.h.b16 %v284
  %v1023 = vunpack.c.l.b16 %v285
  %v1024 = vunpack.c.h.b16 %v285
  %v1025 = vunpack.c.l.b16 %v286
  %v1026 = vunpack.c.h.b16 %v286
  %v1027 = vunpack.c.l.b16 %v287
  %v1028 = vunpack.c.h.b16 %v287
  %v1029 = vunpack.c.l.b16 %v288
  %v1030 = vunpack.c.h.b16 %v288
  %v1031 = vunpack.c.l.b16 %v289
  %v1032 = vunpack.c.h.b16 %v289
  %v1033 = vunpack.c.l.b16 %v290
  %v1034 = vunpack.c.h.b16 %v290
  %v1035 = vunpack.c.l.b16 %v291
  %v1036 = vunpack.c.h.b16 %v291
  %v1037 = vunpack.c.l.b16 %v292
  %v1038 = vunpack.c.h.b16 %v292
  %v1039 = vunpack.c.l.b16 %v293
  %v1040 = vunpack.c.h.b16 %v293
  %v1041 = vunpack.c.l.b16 %v294
  %v1042 = vunpack.c.h.b16 %v294
  %v1043 = vunpack.c.l.b16 %v295
  %v1044 = vunpack.c.h.b16 %v295
  %v1045 = vunpack.c.l.b16 %v296
  %v1046 = vunpack.c.h.b16 %v296
  %v1047 = vunpack.c.l.b16 %v297
  %v1048 = vunpack.c.h.b16 %v297
  %v1049 = vunpack.c.l.b16 %v298
  %v1050 = vunpack.c.h.b16 %v298
  %v1051 = vunpack.c.l.b16 %v299
  %v1052 = vunpack.c.h.b16 %v299
  %v1053 = vunpack.c.l.b16 %v300
  %v1054 = vunpack.c.h.b16 %v300
  %v1055 = vunpack.c.l.b16 %v301
  %v1056 = vunpack.c.h.b16 %v301
  %v1057 = vunpack.c.l.b16 %v302
  %v1058 = vunpack.c.h.b16 %v302
  %v1059 = vunpack.c.l.b16 %v303
  %v1060 = vunpack.c.h.b16 %v303
  %v1061 = vunpack.c.l.b16 %v304
  %v1062 = vunpack.c.h.b16 %v304
  %v1063 = vunpack.c.l.b16 %v305
  %v1064 = vunpack.c.h.b16 %v305
  %v1065 = vunpack.c.l.b16 %v306
  %v1066 = vunpack.c.h.b16 %v306
  %v1067 = vunpack.c.l.b16 %v307
  %v1068 = vunpack.c.h.b16 %v307
  %v1069 = vunpack.c.l.b16 %v308
  %v1070 = vunpack.c.h.b16 %v308
  %v1071 = vunpack.c.l.b16 %v309
  %v1072 = vunpack.c.h.b16 %v309
  %v1073 = vunpack.c.l.b16 %v310
  %v1074 = vunpack.c.h.b16 %v310
  %v1075 = vunpack.c.l.b16 %v311
  %v1076 = vunpack.c.h.b16 %v311
  %v1077 = vunpack.c.l.b16 %v312
  %v1078 = vunpack.c.h.b16 %v312
  %v1079 = vunpack.c.l.b16 %v313
  %v1080 = vunpack.c.h.b16 %v313
  %v1081 = vunpack.c.l.b16 %v314
  %v1082 = vunpack.c.h.b16 %v314
  %v1083 = vunpack.c.l.b16 %v315
  %v1084 = vunpack.c.h.b16 %v315
  %v1085 = vunpack.c.l.b16 %v316
  %v1086 = vunpack.c.h.b16 %v316
  %v1087 = vunpack.c.l.b16 %v317
  %v1088 = vunpack.c.h.b16 %v317
  %v1089 = vunpack.c.l.b16 %v318
  %v1090 = vunpack.c.h.b16 %v318
  %v1091 = vunpack.c.l.b16 %v319
  %v1092 = vunpack.c.h.b16 %v319
  %v1093 = vunpack.c.l.b16 %v320
  %v1094 = vunpack.c.h.b16 %v320
  %v1095 = vunpack.c.l.b16 %v321
  %v1096 = vunpack.c.h.b16 %v321
  %v1097 = vunpack.c.l.b16 %v322
  %v1098 = vunpack.c.h.b16 %v322
  %v1099 = vunpack.c.l.b16 %v323
  %v1100 = vunpack.c.h.b16 %v323
  %v1101 = vunpack.c.l.b16 %v324
  %v1102 = vunpack.c.h.b16 %v324
  %v1103 = vunpack.c.l.b16 %v325
  %v1104 = vunpack.c.h.b16 %v325
  %v1105 = vunpack.c.l.b16 %v326
  %v1106 = vunpack.c.h.b16 %v326
  %v1107 = vunpack.c.l.b16 %v327
  %v1108 = vunpack.c.h.b16 %v327
  %v1109 = vunpack.c.l.b16 %v328
  %v1110 = vunpack.c.h.b16 %v328
  %v1111 = vunpack.c.l.b16 %v329
  %v1112 = vunpack.c.h.b16 %v329
  %v1113 = vunpack.c.l.b16 %v330
  %v1114 = vunpack.c.h.b16 %v330
  %v1115 = vunpack.c.l.b16 %v331
  %v1116 = vunpack.c.h.b16 %v331
  %v1117 = vunpack.c.l.b16 %v332
  %v1118 = vunpack.c.h.b16 %v332
  %v1119 = vunpack.c.l.b16 %v333
  %v1120 = vunpack.c.h.b16 %v333
  %v1121 = vunpack.c.l.b16 %v334
  %v1122 = vunpack.c.h.b16 %v334
  %v1123 = vunpack.c.l.b16 %v335
  %v1124 = vunpack.c.h.b16 %v335
  %v1125 = vunpack.c.l.b16 %v336
  %v1126 = vunpack.c.h.b16 %v336
  %v1127 = vpack.c.b16 %v619, %v615
  %v1128 = vpack.c.b16 %v620, %v616
  %v1129 = vpack.c.b16 %v621, %v617
  %v1130 = vpack.c.b16 %v622, %v618
  %v1131 = vpack.c.b16 %v627, %v623
  %v1132 = vpack.c.b16 %v628, %v624
  %v1133 = vpack.c.b16 %v629, %v625
  %v1134 = vpack.c.b16 %v630, %v626
  %v1135 = vpack.c.b16 %v635, %v631
  %v1136 = vpack.c.b16 %v636, %v632
  %v1137 = vpack.c.b16 %v637, %v633
  %v1138 = vpack.c.b16 %v638, %v634
  %v1139 = vpack.c.b16 %v643, %v639
  %v1140 = vpack.c.b16 %v644, %v640
  %v1141 = vpack.c.b16 %v645, %v641
  %v1142 = vpack.c.b16 %v646, %v642
  %v1143 = vpack.c.b16 %v651, %v647
  %v1144 = vpack.c.b16 %v652, %v648
  %v1145 = vpack.c.b16 %v653, %v649
  %v1146 = vpack.c.b16 %v654, %v650
  %v1147 = vpack.c.b16 %v659, %v655
  %v1148 = vpack.c.b16 %v660, %v656
  %v1149 = vpack.c.b16 %v661, %v657
  %v1150 = vpack.c.b16 %v662, %v658
  %v1151 = vpack.c.b16 %v667, %v663
  %v1152 = vpack.c.b16 %v668, %v664
  %v1153 = vpack.c.b16 %v669, %v665
  %v1154 = vpack.c.b16 %v670, %v666
  %v1155 = vpack.c.b16 %v675, %v671
  %v1156 = vpack.c.b16 %v676, %v672
  %v1157 = vpack.c.b16 %v677, %v673
  %v1158 = vpack.c.b16 %v678, %v674
  %v1159 = vpack.c.b16 %v683, %v679
  %v1160 = vpack.c.b16 %v684, %v680
  %v1161 = vpack.c.b16 %v685, %v681
  %v1162 = vpack.c.b16 %v686, %v682
  %v1163 = vpack.c.b16 %v691, %v687
  %v1164 = vpack.c.b16 %v692, %v688
  %v1165 = vpack.c.b16 %v693, %v689
  %v1166 = vpack.c.b16 %v694, %v690
  %v1167 = vpack.c.b16 %v699, %v695
  %v1168 = vpack.c.b16 %v700, %v696
  %v1169 = vpack.c.b16 %v701, %v697
  %v1170 = vpack.c.b16 %v702, %v698
  %v1171 = vpack.c.b16 %v707, %v703
  %v1172 = vpack.c.b16 %v708, %v704
  %v1173 = vpack.c.b16 %v709, %v705
  %v1174 = vpack.c.b16 %v710, %v706
  %v1175 = vpack.c.b16 %v715, %v711
  %v1176 = vpack.c.b16 %v716, %v712
  %v1177 = vpack.c.b16 %v717, %v713
  %v1178 = vpack.c.b16 %v718, %v714
  %v1179 = vpack.c.b16 %v723, %v719
  %v1180 = vpack.c.b16 %v724, %v720
  %v1181 = vpack.c.b16 %v725, %v721
  %v1182 = vpack.c.b16 %v726, %v722
  %v1183 = vpack.c.b16 %v731, %v727
  %v1184 = vpack.c.b16 %v732, %v728
  %v1185 = vpack.c.b16 %v733, %v729
  %v1186 = vpack.c.b16 %v734, %v730
  %v1187 = vpack.c.b16 %v739, %v735
  %v1188 = vpack.c.b16 %v740, %v736
  %v1189 = vpack.c.b16 %v741, %v737
  %v1190 = vpack.c.b16 %v742, %v738
  %v1191 = vpack.c.b16 %v747, %v743
  %v1192 = vpack.c.b16 %v748, %v744
  %v1193 = vpack.c.b16 %v749, %v745
  %v1194 = vpack.c.b16 %v750, %v746
  %v1195 = vpack.c.b16 %v755, %v751
  %v1196 = vpack.c.b16 %v756, %v752
  %v1197 = vpack.c.b16 %v757, %v753
  %v1198 = vpack.c.b16 %v758, %v754
  %v1199 = vpack.c.b16 %v763, %v759
  %v1200 = vpack.c.b16 %v764, %v760
  %v1201 = vpack.c.b16 %v765, %v761
  %v1202 = vpack.c.b16 %v766, %v762
  %v1203 = vpack.c.b16 %v771, %v767
  %v1204 = vpack.c.b16 %v772, %v768
  %v1205 = vpack.c.b16 %v773, %v769
  %v1206 = vpack.c.b16 %v774, %v770
  %v1207 = vpack.c.b16 %v779, %v775
  %v1208 = vpack.c.b16 %v780, %v776
  %v1209 = vpack.c.b16 %v781, %v777
  %v1210 = vpack.c.b16 %v782, %v778
  %v1211 = vpack.c.b16 %v787, %v783
  %v1212 = vpack.c.b16 %v788, %v784
  %v1213 = vpack.c.b16 %v789, %v785
  %v1214 = vpack.c.b16 %v790, %v786
  %v1215 = vpack.c.b16 %v795, %v791
  %v1216 = vpack.c.b16 %v796, %v792
  %v1217 = vpack.c.b16 %v797, %v793
  %v1218 = vpack.c.b16 %v798, %v794
  %v1219 = vpack.c.b16 %v803, %v799
  %v1220 = vpack.c.b16 %v804, %v800
  %v1221 = vpack.c.b16 %v805, %v801
  %v1222 = vpack.c.b16 %v806, %v802
  %v1223 = vpack.c.b16 %v811, %v807
  %v1224 = vpack.c.b16 %v812, %v808
  %v1225 = vpack.c.b16 %v813, %v809
  %v1226 = vpack.c.b16 %v814, %v810
  %v1227 = vpack.c.b16 %v819, %v815
  %v1228 = vpack.c.b16 %v820, %v816
  %v1229 = vpack.c.b16 %v821, %v817
  %v1230 = vpack.c.b16 %v822, %v818
  %v1231 = vpack.c.b16 %v827, %v823
  %v1232 = vpack.c.b16 %v828, %v824
  %v1233 = vpack.c.b16 %v829, %v825
  %v1234 = vpack.c.b16 %v830, %v826
  %v1235 = vpack.c.b16 %v835, %v831
  %v1236 = vpack.c.b16 %v836, %v832
  %v1237 = vpack.c.b16 %v837, %v833
  %v1238 = vpack.c.b16 %v838, %v834
  %v1239 = vpack.c.b16 %v843, %v839
  %v1240 = vpack.c.b16 %v844, %v840
  %v1241 = vpack.c.b16 %v845, %v841
  %v1242 = vpack.c.b16 %v846, %v842
  %v1243 = vpack.c.b16 %v851, %v847
  %v1244 = vpack.c.b16 %v852, %v848
  %v1245 = vpack.c.b16 %v853, %v849
  %v1246 = vpack.c.b16 %v854, %v850
  %v1247 = vpack.c.b16 %v859, %v855
  %v1248 = vpack.c.b16 %v860, %v856
  %v1249 = vpack.c.b16 %v861, %v857
  %v1250 = vpack.c.b16 %v862, %v858
  %v1251 = vpack.c.b16 %v867, %v863
  %v1252 = vpack.c.b16 %v868, %v864
  %v1253 = vpack.c.b16 %v869, %v865
  %v1254 = vpack.c.b16 %v870, %v866
  %v1255 = vpack.c.b16 %v875, %v871
  %v1256 = vpack.c.b16 %v876, %v872
  %v1257 = vpack.c.b16 %v877, %v873
  %v1258 = vpack.c.b16 %v878, %v874
  %v1259 = vpack.c.b16 %v883, %v879
  %v1260 = vpack.c.b16 %v884, %v880
  %v1261 = vpack.c.b16 %v885, %v881
  %v1262 = vpack.c.b16 %v886, %v882
  %v1263 = vpack.c.b16 %v891, %v887
  %v1264 = vpack.c.b16 %v892, %v888
  %v1265 = vpack.c.b16 %v893, %v889
  %v1266 = vpack.c.b16 %v894, %v890
  %v1267 = vpack.c.b16 %v899, %v895
  %v1268 = vpack.c.b16 %v900, %v896
  %v1269 = vpack.c.b16 %v901, %v897
  %v1270 = vpack.c.b16 %v902, %v898
  %v1271 = vpack.c.b16 %v907, %v903
  %v1272 = vpack.c.b16 %v908, %v904
  %v1273 = vpack.c.b16 %v909, %v905
  %v1274 = vpack.c.b16 %v910, %v906
  %v1275 = vpack.c.b16 %v915, %v911
  %v1276 = vpack.c.b16 %v916, %v912
  %v1277 = vpack.c.b16 %v917, %v913
  %v1278 = vpack.c.b16 %v918, %v914
  %v1279 = vpack.c.b16 %v923, %v919
  %v1280 = vpack.c.b16 %v924, %v920
  %v1281 = vpack.c.b16 %v925, %v921
  %v1282 = vpack.c.b16 %v926, %v922
  %v1283 = vpack.c.b16 %v931, %v927
  %v1284 = vpack.c.b16 %v932, %v928
  %v1285 = vpack.c.b16 %v933, %v929
  %v1286 = vpack.c.b16 %v934, %v930
  %v1287 = vpack.c.b16 %v939, %v935
  %v1288 = vpack.c.b16 %v940, %v936
  %v1289 = vpack.c.b16 %v941, %v937
  %v1290 = vpack.c.b16 %v942, %v938
  %v1291 = vpack.c.b16 %v947, %v943
  %v1292 = vpack.c.b16 %v948, %v944
  %v1293 = vpack.c.b16 %v949, %v945
  %v1294 = vpack.c.b16 %v950, %v946
  %v1295 = vpack.c.b16 %v955, %v951
  %v1296 = vpack.c.b16 %v956, %v952
  %v1297 = vpack.c.b16 %v957, %v953
  %v1298 = vpack.c.b16 %v958, %v954
  %v1299 = vpack.c.b16 %v963, %v959
  %v1300 = vpack.c.b16 %v964, %v960
  %v1301 = vpack.c.b16 %v965, %v961
  %v1302 = vpack.c.b16 %v966, %v962
  %v1303 = vpack.c.b16 %v971, %v967
  %v1304 = vpack.c.b16 %v972, %v968
  %v1305 = vpack.c.b16 %v973, %v969
  %v1306 = vpack.c.b16 %v974, %v970
  %v1307 = vpack.c.b16 %v979, %v975
  %v1308 = vpack.c.b16 %v980, %v976
  %v1309 = vpack.c.b16 %v981, %v977
  %v1310 = vpack.c.b16 %v982, %v978
  %v1311 = vpack.c.b16 %v987, %v983
  %v1312 = vpack.c.b16 %v988, %v984
  %v1313 = vpack.c.b16 %v989, %v985
  %v1314 = vpack.c.b16 %v990, %v986
  %v1315 = vpack.c.b16 %v995, %v991
  %v1316 = vpack.c.b16 %v996, %v992
  %v1317 = vpack.c.b16 %v997, %v993
  %v1318 = vpack.c.b16 %v998, %v994
  %v1319 = vpack.c.b16 %v1003, %v999
  %v1320 = vpack.c.b16 %v1004, %v1000
  %v1321 = vpack.c.b16 %v1005, %v1001
  %v1322 = vpack.c.b16 %v1006, %v1002
  %v1323 = vpack.c.b16 %v1011, %v1007
  %v1324 = vpack.c.b16 %v1012, %v1008
  %v1325 = vpack.c.b16 %v1013, %v1009
  %v1326 = vpack.c.b16 %v1014, %v1010
  %v1327 = vpack.c.b16 %v1019, %v1015
  %v1328 = vpack.c.b16 %v1020, %v1016
  %v1329 = vpack.c.b16 %v1021, %v1017
  %v1330 = vpack.c.b16 %v1022, %v1018
  %v1331 = vpack.c.b16 %v1027, %v1023
  %v1332 = vpack.c.b16 %v1028, %v1024
  %v1333 = vpack.c.b16 %v1029, %v1025
  %v1334 = vpack.c.b16 %v1030, %v1026
  %v1335 = vpack.c.b16 %v1035, %v1031
  %v1336 = vpack.c.b16 %v1036, %v1032
  %v1337 = vpack.c.b16 %v1037, %v1033
  %v1338 = vpack.c.b16 %v1038, %v1034
  %v1339 = vpack.c.b16 %v1043, %v1039
  %v1340 = vpack.c.b16 %v1044, %v1040
  %v1341 = vpack.c.b16 %v1045, %v1041
  %v1342 = vpack.c.b16 %v1046, %v1042
  %v1343 = vpack.c.b16 %v1051, %v1047
  %v1344 = vpack.c.b16 %v1052, %v1048
  %v1345 = vpack.c.b16 %v1053, %v1049
  %v1346 = vpack.c.b16 %v1054, %v1050
  %v1347 = vpack.c.b16 %v1059, %v1055
  %v1348 = vpack.c.b16 %v1060, %v1056
  %v1349 = vpack.c.b16 %v1061, %v1057
  %v1350 = vpack.c.b16 %v1062, %v1058
  %v1351 = vpack.c.b16 %v1067, %v1063
  %v1352 = vpack.c.b16 %v1068, %v1064
  %v1353 = vpack.c.b16 %v1069, %v1065
  %v1354 = vpack.c.b16 %v1070, %v1066
  %v1355 = vpack.c.b16 %v1075, %v1071
  %v1356 = vpack.c.b16 %v1076, %v1072
  %v1357 = vpack.c.b16 %v1077, %v1073
  %v1358 = vpack.c.b16 %v1078, %v1074
  %v1359 = vpack.c.b16 %v1083, %v1079
  %v1360 = vpack.c.b16 %v1084, %v1080
  %v1361 = vpack.c.b16 %v1085, %v1081
  %v1362 = vpack.c.b16 %v1086, %v1082
  %v1363 = vpack.c.b16 %v1091, %v1087
  %v1364 = vpack.c.b16 %v1092, %v1088
  %v1365 = vpack.c.b16 %v1093, %v1089
  %v1366 = vpack.c.b16 %v1094, %v1090
  %v1367 = vpack.c.b16 %v1099, %v1095
  %v1368 = vpack.c.b16 %v1100, %v1096
  %v1369 = vpack.c.b16 %v1101, %v1097
  %v1370 = vpack.c.b16 %v1102, %v1098
  %v1371 = vpack.c.b16 %v1107, %v1103
  %v1372 = vpack.c.b16 %v1108, %v1104
  %v1373 = vpack.c.b16 %v1109, %v1105
  %v1374 = vpack.c.b16 %v1110, %v1106
  %v1375 = vpack.c.b16 %v1115, %v1111
  %v1376 = vpack.c.b16 %v1116, %v1112
  %v1377 = vpack.c.b16 %v1117, %v1113
  %v1378 = vpack.c.b16 %v1118, %v1114
  %v1379 = vpack.c.b16 %v1123, %v1119
  %v1380 = vpack.c.b16 %v1124, %v1120
  %v1381 = vpack.c.b16 %v1125, %v1121
  %v1382 = vpack.c.b16 %v1126, %v1122
  %1639 = vmatprep.subr.bf16.mxu0 %v1128
  %1640 = vmatpush1.bf16.msra.mxu0 %v1127
  %1641 = vmatprep.subr.bf16.mxu0 %v1132
  %1642 = vmatpush1.bf16.msra.mxu0 %v1131
  %1643 = vmatprep.subr.bf16.mxu0 %v1136
  %1644 = vmatpush1.bf16.msra.mxu0 %v1135
  %1645 = vmatprep.subr.bf16.mxu0 %v1140
  %1646 = vmatpush1.bf16.msra.mxu0 %v1139
  %1647 = vmatprep.subr.bf16.mxu0 %v1144
  %1648 = vmatpush1.bf16.msra.mxu0 %v1143
  %1649 = vmatprep.subr.bf16.mxu0 %v1148
  %1650 = vmatpush1.bf16.msra.mxu0 %v1147
  %1651 = vmatprep.subr.bf16.mxu0 %v1152
  %1652 = vmatpush1.bf16.msra.mxu0 %v1151
  %1653 = vmatprep.subr.bf16.mxu0 %v1156
  %1654 = vmatpush1.bf16.msra.mxu0 %v1155
  %1655 = vmatprep.subr.bf16.mxu0 %v1160
  %1656 = vmatpush1.bf16.msra.mxu0 %v1159
  %1657 = vmatprep.subr.bf16.mxu0 %v1164
  %1658 = vmatpush1.bf16.msra.mxu0 %v1163
  %1659 = vmatprep.subr.bf16.mxu0 %v1168
  %1660 = vmatpush1.bf16.msra.mxu0 %v1167
  %1661 = vmatprep.subr.bf16.mxu0 %v1172
  %1662 = vmatpush1.bf16.msra.mxu0 %v1171
  %1663 = vmatprep.subr.bf16.mxu0 %v1176
  %1664 = vmatpush1.bf16.msra.mxu0 %v1175
  %1665 = vmatprep.subr.bf16.mxu0 %v1180
  %1666 = vmatpush1.bf16.msra.mxu0 %v1179
  %1667 = vmatprep.subr.bf16.mxu0 %v1184
  %1668 = vmatpush1.bf16.msra.mxu0 %v1183
  %1669 = vmatprep.subr.bf16.mxu0 %v1188
  %1670 = vmatpush1.bf16.msra.mxu0 %v1187
  %1671 = vmatprep.mubr.bf16.mxu0 %v74
  %1672 = vmatmul.mubr.bf16.gmra.mrb[0].mxu0 %v73
  %v1673 = vpop.f32.mrb[0].mxu0
  %v1674 = vadd.f32 %v342, %v1673
  %v1675 = vpop.f32.mrb[0].mxu0
  %v1676 = vadd.f32 %v346, %v1675
  %v1677 = vpop.f32.mrb[0].mxu0
  %v1678 = vadd.f32 %v342, %v1677
  %v1679 = vpop.f32.mrb[0].mxu0
  %v1680 = vadd.f32 %v346, %v1679
  %1681 = vdwg.mxu0
  %1682 = vmatprep.subr.bf16.mxu0 %v1192
  %1683 = vmatpush1.bf16.msra.mxu0 %v1191
  %1684 = vmatprep.subr.bf16.mxu0 %v1196
  %1685 = vmatpush1.bf16.msra.mxu0 %v1195
  %1686 = vmatprep.subr.bf16.mxu0 %v1200
  %1687 = vmatpush1.bf16.msra.mxu0 %v1199
  %1688 = vmatprep.subr.bf16.mxu0 %v1204
  %1689 = vmatpush1.bf16.msra.mxu0 %v1203
  %1690 = vmatprep.subr.bf16.mxu0 %v1208
  %1691 = vmatpush1.bf16.msra.mxu0 %v1207
  %1692 = vmatprep.subr.bf16.mxu0 %v1212
  %1693 = vmatpush1.bf16.msra.mxu0 %v1211
  %1694 = vmatprep.subr.bf16.mxu0 %v1216
  %1695 = vmatpush1.bf16.msra.mxu0 %v1215
  %1696 = vmatprep.subr.bf16.mxu0 %v1220
  %1697 = vmatpush1.bf16.msra.mxu0 %v1219
  %1698 = vmatprep.subr.bf16.mxu0 %v1224
  %1699 = vmatpush1.bf16.msra.mxu0 %v1223
  %1700 = vmatprep.subr.bf16.mxu0 %v1228
  %1701 = vmatpush1.bf16.msra.mxu0 %v1227
  %1702 = vmatprep.subr.bf16.mxu0 %v1232
  %1703 = vmatpush1.bf16.msra.mxu0 %v1231
  %1704 = vmatprep.subr.bf16.mxu0 %v1236
  %1705 = vmatpush1.bf16.msra.mxu0 %v1235
  %1706 = vmatprep.subr.bf16.mxu0 %v1240
  %1707 = vmatpush1.bf16.msra.mxu0 %v1239
  %1708 = vmatprep.subr.bf16.mxu0 %v1244
  %1709 = vmatpush1.bf16.msra.mxu0 %v1243
  %1710 = vmatprep.subr.bf16.mxu0 %v1248
  %1711 = vmatpush1.bf16.msra.mxu0 %v1247
  %1712 = vmatprep.subr.bf16.mxu0 %v1252
  %1713 = vmatpush1.bf16.msra.mxu0 %v1251
  %1714 = vmatprep.mubr.bf16.mxu0 %v76
  %1715 = vmatmul.mubr.bf16.gmra.mrb[0].mxu0 %v75
  %v1716 = vpop.f32.mrb[0].mxu0
  %v1717 = vadd.f32 %v1674, %v1716
  %v1718 = vpop.f32.mrb[0].mxu0
  %v1719 = vadd.f32 %v1676, %v1718
  %v1720 = vpop.f32.mrb[0].mxu0
  %v1721 = vadd.f32 %v1678, %v1720
  %v1722 = vpop.f32.mrb[0].mxu0
  %v1723 = vadd.f32 %v1680, %v1722
  %1724 = vdwg.mxu0
  %1725 = vmatprep.subr.bf16.mxu0 %v1256
  %1726 = vmatpush1.bf16.msra.mxu0 %v1255
  %1727 = vmatprep.subr.bf16.mxu0 %v1260
  %1728 = vmatpush1.bf16.msra.mxu0 %v1259
  %1729 = vmatprep.subr.bf16.mxu0 %v1264
  %1730 = vmatpush1.bf16.msra.mxu0 %v1263
  %1731 = vmatprep.subr.bf16.mxu0 %v1268
  %1732 = vmatpush1.bf16.msra.mxu0 %v1267
  %1733 = vmatprep.subr.bf16.mxu0 %v1272
  %1734 = vmatpush1.bf16.msra.mxu0 %v1271
  %1735 = vmatprep.subr.bf16.mxu0 %v1276
  %1736 = vmatpush1.bf16.msra.mxu0 %v1275
  %1737 = vmatprep.subr.bf16.mxu0 %v1280
  %1738 = vmatpush1.bf16.msra.mxu0 %v1279
  %1739 = vmatprep.subr.bf16.mxu0 %v1284
  %1740 = vmatpush1.bf16.msra.mxu0 %v1283
  %1741 = vmatprep.subr.bf16.mxu0 %v1288
  %1742 = vmatpush1.bf16.msra.mxu0 %v1287
  %1743 = vmatprep.subr.bf16.mxu0 %v1292
  %1744 = vmatpush1.bf16.msra.mxu0 %v1291
  %1745 = vmatprep.subr.bf16.mxu0 %v1296
  %1746 = vmatpush1.bf16.msra.mxu0 %v1295
  %1747 = vmatprep.subr.bf16.mxu0 %v1300
  %1748 = vmatpush1.bf16.msra.mxu0 %v1299
  %1749 = vmatprep.subr.bf16.mxu0 %v1304
  %1750 = vmatpush1.bf16.msra.mxu0 %v1303
  %1751 = vmatprep.subr.bf16.mxu0 %v1308
  %1752 = vmatpush1.bf16.msra.mxu0 %v1307
  %1753 = vmatprep.subr.bf16.mxu0 %v1312
  %1754 = vmatpush1.bf16.msra.mxu0 %v1311
  %1755 = vmatprep.subr.bf16.mxu0 %v1316
  %1756 = vmatpush1.bf16.msra.mxu0 %v1315
  %1757 = vmatprep.mubr.bf16.mxu0 %v78
  %1758 = vmatmul.mubr.bf16.gmra.mrb[0].mxu0 %v77
  %v1759 = vpop.f32.mrb[0].mxu0
  %v1760 = vadd.f32 %v1717, %v1759
  %v1761 = vpop.f32.mrb[0].mxu0
  %v1762 = vadd.f32 %v1719, %v1761
  %v1763 = vpop.f32.mrb[0].mxu0
  %v1764 = vadd.f32 %v1721, %v1763
  %v1765 = vpop.f32.mrb[0].mxu0
  %v1766 = vadd.f32 %v1723, %v1765
  %1767 = vdwg.mxu0
  %1768 = vmatprep.subr.bf16.mxu0 %v1320
  %1769 = vmatpush1.bf16.msra.mxu0 %v1319
  %1770 = vmatprep.subr.bf16.mxu0 %v1324
  %1771 = vmatpush1.bf16.msra.mxu0 %v1323
  %1772 = vmatprep.subr.bf16.mxu0 %v1328
  %1773 = vmatpush1.bf16.msra.mxu0 %v1327
  %1774 = vmatprep.subr.bf16.mxu0 %v1332
  %1775 = vmatpush1.bf16.msra.mxu0 %v1331
  %1776 = vmatprep.subr.bf16.mxu0 %v1336
  %1777 = vmatpush1.bf16.msra.mxu0 %v1335
  %1778 = vmatprep.subr.bf16.mxu0 %v1340
  %1779 = vmatpush1.bf16.msra.mxu0 %v1339
  %1780 = vmatprep.subr.bf16.mxu0 %v1344
  %1781 = vmatpush1.bf16.msra.mxu0 %v1343
  %1782 = vmatprep.subr.bf16.mxu0 %v1348
  %1783 = vmatpush1.bf16.msra.mxu0 %v1347
  %1784 = vmatprep.subr.bf16.mxu0 %v1352
  %1785 = vmatpush1.bf16.msra.mxu0 %v1351
  %1786 = vmatprep.subr.bf16.mxu0 %v1356
  %1787 = vmatpush1.bf16.msra.mxu0 %v1355
  %1788 = vmatprep.subr.bf16.mxu0 %v1360
  %1789 = vmatpush1.bf16.msra.mxu0 %v1359
  %1790 = vmatprep.subr.bf16.mxu0 %v1364
  %1791 = vmatpush1.bf16.msra.mxu0 %v1363
  %1792 = vmatprep.subr.bf16.mxu0 %v1368
  %1793 = vmatpush1.bf16.msra.mxu0 %v1367
  %1794 = vmatprep.subr.bf16.mxu0 %v1372
  %1795 = vmatpush1.bf16.msra.mxu0 %v1371
  %1796 = vmatprep.subr.bf16.mxu0 %v1376
  %1797 = vmatpush1.bf16.msra.mxu0 %v1375
  %1798 = vmatprep.subr.bf16.mxu0 %v1380
  %1799 = vmatpush1.bf16.msra.mxu0 %v1379
  %1800 = vmatprep.mubr.bf16.mxu0 %v80
  %1801 = vmatmul.mubr.bf16.gmra.mrb[0].mxu0 %v79
  %v1802 = vpop.f32.mrb[0].mxu0
  %v1803 = vadd.f32 %v1760, %v1802
  %v1804 = vpop.f32.mrb[0].mxu0
  %v1805 = vadd.f32 %v1762, %v1804
  %v1806 = vpop.f32.mrb[0].mxu0
  %v1807 = vadd.f32 %v1764, %v1806
  %v1808 = vpop.f32.mrb[0].mxu0
  %v1809 = vadd.f32 %v1766, %v1808
  %1810 = vdwg.mxu0
  %1811 = vmatprep.subr.bf16.mxu0 %v1130
  %1812 = vmatpush1.bf16.msra.mxu0 %v1129
  %1813 = vmatprep.subr.bf16.mxu0 %v1134
  %1814 = vmatpush1.bf16.msra.mxu0 %v1133
  %1815 = vmatprep.subr.bf16.mxu0 %v1138
  %1816 = vmatpush1.bf16.msra.mxu0 %v1137
  %1817 = vmatprep.subr.bf16.mxu0 %v1142
  %1818 = vmatpush1.bf16.msra.mxu0 %v1141
  %1819 = vmatprep.subr.bf16.mxu0 %v1146
  %1820 = vmatpush1.bf16.msra.mxu0 %v1145
  %1821 = vmatprep.subr.bf16.mxu0 %v1150
  %1822 = vmatpush1.bf16.msra.mxu0 %v1149
  %1823 = vmatprep.subr.bf16.mxu0 %v1154
  %1824 = vmatpush1.bf16.msra.mxu0 %v1153
  %1825 = vmatprep.subr.bf16.mxu0 %v1158
  %1826 = vmatpush1.bf16.msra.mxu0 %v1157
  %1827 = vmatprep.subr.bf16.mxu0 %v1162
  %1828 = vmatpush1.bf16.msra.mxu0 %v1161
  %1829 = vmatprep.subr.bf16.mxu0 %v1166
  %1830 = vmatpush1.bf16.msra.mxu0 %v1165
  %1831 = vmatprep.subr.bf16.mxu0 %v1170
  %1832 = vmatpush1.bf16.msra.mxu0 %v1169
  %1833 = vmatprep.subr.bf16.mxu0 %v1174
  %1834 = vmatpush1.bf16.msra.mxu0 %v1173
  %1835 = vmatprep.subr.bf16.mxu0 %v1178
  %1836 = vmatpush1.bf16.msra.mxu0 %v1177
  %1837 = vmatprep.subr.bf16.mxu0 %v1182
  %1838 = vmatpush1.bf16.msra.mxu0 %v1181
  %1839 = vmatprep.subr.bf16.mxu0 %v1186
  %1840 = vmatpush1.bf16.msra.mxu0 %v1185
  %1841 = vmatprep.subr.bf16.mxu0 %v1190
  %1842 = vmatpush1.bf16.msra.mxu0 %v1189
  %1843 = vmatprep.mubr.bf16.mxu0 %v74
  %1844 = vmatmul.mubr.bf16.gmra.mrb[0].mxu0 %v73
  %v1845 = vpop.f32.mrb[0].mxu0
  %v1846 = vadd.f32 %v350, %v1845
  %v1847 = vpop.f32.mrb[0].mxu0
  %v1848 = vadd.f32 %v354, %v1847
  %v1849 = vpop.f32.mrb[0].mxu0
  %v1850 = vadd.f32 %v350, %v1849
  %v1851 = vpop.f32.mrb[0].mxu0
  %v1852 = vadd.f32 %v354, %v1851
  %1853 = vdwg.mxu0
  %1854 = vmatprep.subr.bf16.mxu0 %v1194
  %1855 = vmatpush1.bf16.msra.mxu0 %v1193
  %1856 = vmatprep.subr.bf16.mxu0 %v1198
  %1857 = vmatpush1.bf16.msra.mxu0 %v1197
  %1858 = vmatprep.subr.bf16.mxu0 %v1202
  %1859 = vmatpush1.bf16.msra.mxu0 %v1201
  %1860 = vmatprep.subr.bf16.mxu0 %v1206
  %1861 = vmatpush1.bf16.msra.mxu0 %v1205
  %1862 = vmatprep.subr.bf16.mxu0 %v1210
  %1863 = vmatpush1.bf16.msra.mxu0 %v1209
  %1864 = vmatprep.subr.bf16.mxu0 %v1214
  %1865 = vmatpush1.bf16.msra.mxu0 %v1213
  %1866 = vmatprep.subr.bf16.mxu0 %v1218
  %1867 = vmatpush1.bf16.msra.mxu0 %v1217
  %1868 = vmatprep.subr.bf16.mxu0 %v1222
  %1869 = vmatpush1.bf16.msra.mxu0 %v1221
  %1870 = vmatprep.subr.bf16.mxu0 %v1226
  %1871 = vmatpush1.bf16.msra.mxu0 %v1225
  %1872 = vmatprep.subr.bf16.mxu0 %v1230
  %1873 = vmatpush1.bf16.msra.mxu0 %v1229
  %1874 = vmatprep.subr.bf16.mxu0 %v1234
  %1875 = vmatpush1.bf16.msra.mxu0 %v1233
  %1876 = vmatprep.subr.bf16.mxu0 %v1238
  %1877 = vmatpush1.bf16.msra.mxu0 %v1237
  %1878 = vmatprep.subr.bf16.mxu0 %v1242
  %1879 = vmatpush1.bf16.msra.mxu0 %v1241
  %1880 = vmatprep.subr.bf16.mxu0 %v1246
  %1881 = vmatpush1.bf16.msra.mxu0 %v1245
  %1882 = vmatprep.subr.bf16.mxu0 %v1250
  %1883 = vmatpush1.bf16.msra.mxu0 %v1249
  %1884 = vmatprep.subr.bf16.mxu0 %v1254
  %1885 = vmatpush1.bf16.msra.mxu0 %v1253
  %1886 = vmatprep.mubr.bf16.mxu0 %v76
  %1887 = vmatmul.mubr.bf16.gmra.mrb[0].mxu0 %v75
  %v1888 = vpop.f32.mrb[0].mxu0
  %v1889 = vadd.f32 %v1846, %v1888
  %v1890 = vpop.f32.mrb[0].mxu0
  %v1891 = vadd.f32 %v1848, %v1890
  %v1892 = vpop.f32.mrb[0].mxu0
  %v1893 = vadd.f32 %v1850, %v1892
  %v1894 = vpop.f32.mrb[0].mxu0
  %v1895 = vadd.f32 %v1852, %v1894
  %1896 = vdwg.mxu0
  %1897 = vmatprep.subr.bf16.mxu0 %v1258
  %1898 = vmatpush1.bf16.msra.mxu0 %v1257
  %1899 = vmatprep.subr.bf16.mxu0 %v1262
  %1900 = vmatpush1.bf16.msra.mxu0 %v1261
  %1901 = vmatprep.subr.bf16.mxu0 %v1266
  %1902 = vmatpush1.bf16.msra.mxu0 %v1265
  %1903 = vmatprep.subr.bf16.mxu0 %v1270
  %1904 = vmatpush1.bf16.msra.mxu0 %v1269
  %1905 = vmatprep.subr.bf16.mxu0 %v1274
  %1906 = vmatpush1.bf16.msra.mxu0 %v1273
  %1907 = vmatprep.subr.bf16.mxu0 %v1278
  %1908 = vmatpush1.bf16.msra.mxu0 %v1277
  %1909 = vmatprep.subr.bf16.mxu0 %v1282
  %1910 = vmatpush1.bf16.msra.mxu0 %v1281
  %1911 = vmatprep.subr.bf16.mxu0 %v1286
  %1912 = vmatpush1.bf16.msra.mxu0 %v1285
  %1913 = vmatprep.subr.bf16.mxu0 %v1290
  %1914 = vmatpush1.bf16.msra.mxu0 %v1289
  %1915 = vmatprep.subr.bf16.mxu0 %v1294
  %1916 = vmatpush1.bf16.msra.mxu0 %v1293
  %1917 = vmatprep.subr.bf16.mxu0 %v1298
  %1918 = vmatpush1.bf16.msra.mxu0 %v1297
  %1919 = vmatprep.subr.bf16.mxu0 %v1302
  %1920 = vmatpush1.bf16.msra.mxu0 %v1301
  %1921 = vmatprep.subr.bf16.mxu0 %v1306
  %1922 = vmatpush1.bf16.msra.mxu0 %v1305
  %1923 = vmatprep.subr.bf16.mxu0 %v1310
  %1924 = vmatpush1.bf16.msra.mxu0 %v1309
  %1925 = vmatprep.subr.bf16.mxu0 %v1314
  %1926 = vmatpush1.bf16.msra.mxu0 %v1313
  %1927 = vmatprep.subr.bf16.mxu0 %v1318
  %1928 = vmatpush1.bf16.msra.mxu0 %v1317
  %1929 = vmatprep.mubr.bf16.mxu0 %v78
  %1930 = vmatmul.mubr.bf16.gmra.mrb[0].mxu0 %v77
  %v1931 = vpop.f32.mrb[0].mxu0
  %v1932 = vadd.f32 %v1889, %v1931
  %v1933 = vpop.f32.mrb[0].mxu0
  %v1934 = vadd.f32 %v1891, %v1933
  %v1935 = vpop.f32.mrb[0].mxu0
  %v1936 = vadd.f32 %v1893, %v1935
  %v1937 = vpop.f32.mrb[0].mxu0
  %v1938 = vadd.f32 %v1895, %v1937
  %1939 = vdwg.mxu0
  %1940 = vmatprep.subr.bf16.mxu0 %v1322
  %1941 = vmatpush1.bf16.msra.mxu0 %v1321
  %1942 = vmatprep.subr.bf16.mxu0 %v1326
  %1943 = vmatpush1.bf16.msra.mxu0 %v1325
  %1944 = vmatprep.subr.bf16.mxu0 %v1330
  %1945 = vmatpush1.bf16.msra.mxu0 %v1329
  %1946 = vmatprep.subr.bf16.mxu0 %v1334
  %1947 = vmatpush1.bf16.msra.mxu0 %v1333
  %1948 = vmatprep.subr.bf16.mxu0 %v1338
  %1949 = vmatpush1.bf16.msra.mxu0 %v1337
  %1950 = vmatprep.subr.bf16.mxu0 %v1342
  %1951 = vmatpush1.bf16.msra.mxu0 %v1341
  %1952 = vmatprep.subr.bf16.mxu0 %v1346
  %1953 = vmatpush1.bf16.msra.mxu0 %v1345
  %1954 = vmatprep.subr.bf16.mxu0 %v1350
  %1955 = vmatpush1.bf16.msra.mxu0 %v1349
  %1956 = vmatprep.subr.bf16.mxu0 %v1354
  %1957 = vmatpush1.bf16.msra.mxu0 %v1353
  %1958 = vmatprep.subr.bf16.mxu0 %v1358
  %1959 = vmatpush1.bf16.msra.mxu0 %v1357
  %1960 = vmatprep.subr.bf16.mxu0 %v1362
  %1961 = vmatpush1.bf16.msra.mxu0 %v1361
  %1962 = vmatprep.subr.bf16.mxu0 %v1366
  %1963 = vmatpush1.bf16.msra.mxu0 %v1365
  %1964 = vmatprep.subr.bf16.mxu0 %v1370
  %1965 = vmatpush1.bf16.msra.mxu0 %v1369
  %1966 = vmatprep.subr.bf16.mxu0 %v1374
  %1967 = vmatpush1.bf16.msra.mxu0 %v1373
  %1968 = vmatprep.subr.bf16.mxu0 %v1378
  %1969 = vmatpush1.bf16.msra.mxu0 %v1377
  %1970 = vmatprep.subr.bf16.mxu0 %v1382
  %1971 = vmatpush1.bf16.msra.mxu0 %v1381
  %1972 = vmatprep.mubr.bf16.mxu0 %v80
  %1973 = vmatmul.mubr.bf16.gmra.mrb[0].mxu0 %v79
  %v1974 = vpop.f32.mrb[0].mxu0
  %v1975 = vadd.f32 %v1932, %v1974
  %v1976 = vpop.f32.mrb[0].mxu0
  %v1977 = vadd.f32 %v1934, %v1976
  %v1978 = vpop.f32.mrb[0].mxu0
  %v1979 = vadd.f32 %v1936, %v1978
  %v1980 = vpop.f32.mrb[0].mxu0
  %v1981 = vadd.f32 %v1938, %v1980
  %1982 = vdwg.mxu0
  %v1983 = vmax.f32 %v1803, 0.0
  %v1984 = vmax.f32 %v1805, 0.0
  %v1985 = vmax.f32 %v1975, 0.0
  %v1986 = vmax.f32 %v1977, 0.0
  %v1987 = vmax.f32 %v1807, 0.0
  %v1988 = vmax.f32 %v1809, 0.0
  %v1989 = vmax.f32 %v1979, 0.0
  %v1990 = vmax.f32 %v1981, 0.0
  %v1991 = vld [vmem:[#allocation2] sm:$0xff]
  %v1992 = vld [vmem:[#allocation2 + $0x8] sm:$0xff]
  %v1993 = vld [vmem:[#allocation2 + $0x10] sm:$0xff]
  %v1994 = vld [vmem:[#allocation2 + $0x18] sm:$0xff]
  %v1995 = vadd.f32 %v1983, %v1987
  %v1996 = vadd.f32 %v1984, %v1988
  %v1997 = vadd.f32 %v1985, %v1989
  %v1998 = vadd.f32 %v1986, %v1990
  %v1999 = vadd.f32 %v1991, %v1995
  %v2000 = vadd.f32 %v1992, %v1996
  %v2001 = vadd.f32 %v1993, %v1997
  %v2002 = vadd.f32 %v1994, %v1998
  %2003 = vst [vmem:[#allocation2] sm:$0xff] %v1999
  %2004 = vst [vmem:[#allocation2 + $0x8] sm:$0xff] %v2000
  %2005 = vst [vmem:[#allocation2 + $0x10] sm:$0xff] %v2001
  %2006 = vst [vmem:[#allocation2 + $0x18] sm:$0xff] %v2002
  // Predicated region
  $region18: #{_clam_forward_impl.1} parent=0 // pred_check
    %p2007 = pneg %p49
  $region19: #{_clam_forward_impl.1} parent=0 // pred_check_branch
    %2009 = sbr.rel (%p2007) target = $region21
  $region20: #{_clam_forward_impl.1} parent=0 // pred_region
    %v2010 = vld [vmem:[#allocation2] sm:$0xff]
    %v2011 = vld [vmem:[#allocation2 + $0x8] sm:$0xff]
    %v2012 = vld [vmem:[#allocation2 + $0x10] sm:$0xff]
    %v2013 = vld [vmem:[#allocation2 + $0x18] sm:$0xff]
    %2014 = vst [vmem:[%s3] sm:$0xff] %v2010
    %2015 = vst [vmem:[%s3 + $0x8] sm:$0xff] %v2011
    %2016 = vst [vmem:[%s3 + $0x10] sm:$0xff] %v2012
    %2017 = vst [vmem:[%s3 + $0x18] sm:$0xff] %v2013
  $region21: #{_clam_forward_impl.1} parent=0 // pred_fallthru
    _
  // Predicated region
  $region22: #{_clam_forward_impl.1} parent=0 // pred_check
    _
  $region23: #{_clam_forward_impl.1} parent=0 // pred_check_branch
    %2019 = sbr.rel (0) target = $region25
  $region24: #{_clam_forward_impl.1} parent=0 // pred_region
    _
  $region25: #{_clam_forward_impl.1} parent=0 // pred_fallthru
    _
  // Predicated region
  $region26: #{_clam_forward_impl.1} parent=0 // pred_check
    _
  $region27: #{_clam_forward_impl.1} parent=0 // pred_check_branch
    %2021 = sbr.rel (0) target = $region29
  $region28: #{_clam_forward_impl.1} parent=0 // pred_region
    _
  $region29: #{_clam_forward_impl.1} parent=0 // pred_fallthru
    _

</llo_original>
